<compile_context>
chip_gen: v5e
topology: v5e:2x2
jax: 0.10.0
libtpu: 0.0.40
codegen_flags: <defaults>
</compile_context>

<pallas_src>
import functools
import math

import jax
import jax.numpy as jnp
from jax.experimental import pallas as pl
from jax.experimental.pallas import tpu as pltpu


def _layer_norm(x, gamma, beta, eps):
    mu = jnp.mean(x, axis=-1, keepdims=True)
    var = jnp.mean(jnp.square(x - mu), axis=-1, keepdims=True)
    return (x - mu) * jax.lax.rsqrt(var + eps) * gamma + beta


def encoder_stack_kernel(x_ref, addmask_ref,
                         wqkv_ref, bqkv_ref, wo_ref, bo_ref, g1_ref, be1_ref,
                         wi_ref, bi_ref, w2_ref, b2_ref, g2_ref, be2_ref,
                         out_ref, act_ref, *, head_num, head_size, ln_eps):
    # grid = (batch_block, layer); one grid step = one encoder layer for Bblk
    # batch elements.
    layer = pl.program_id(1)

    # Load this batch block's hidden states into the VMEM carry on the first layer.
    @pl.when(layer == 0)
    def _():
        act_ref[...] = x_ref[...].astype(jnp.float32)

    x = act_ref[...]                               # (Bblk, S, H) f32 residual stream
    Bblk, S, H = x.shape
    M = Bblk * S
    G = Bblk * head_num

    x2d = x.reshape(M, H)                          # fold batch block into matmul M dim
    x_b = x2d.astype(jnp.bfloat16)

    # --- fused QKV projection (scale 1/sqrt(head_size) pre-folded into Wq/bq) ---
    qkv = jnp.dot(x_b, wqkv_ref[0],
                  preferred_element_type=jnp.float32) + bqkv_ref[0]    # (M, 3H) f32

    def split_heads(t):
        # (M, H) f32 -> (G, S, head_size) bf16; cast BEFORE the relayout so the
        # transpose moves half the bytes.
        t = t.astype(jnp.bfloat16).reshape(Bblk, S, head_num, head_size)
        return jnp.transpose(t, (0, 2, 1, 3)).reshape(G, S, head_size)

    q = split_heads(qkv[:, 0 * H:1 * H])
    k = split_heads(qkv[:, 1 * H:2 * H])
    v = split_heads(qkv[:, 2 * H:3 * H])

    # --- batched multi-head attention (batch block x heads folded into one axis) ---
    add_mask = addmask_ref[...]                    # (Bblk, S, S) f32, precomputed

    scores = jnp.einsum('gqd,gkd->gqk', q, k,
                        preferred_element_type=jnp.float32)            # (G, S, S)
    scores = scores.reshape(Bblk, head_num, S, S) + add_mask[:, None]
    scores = scores - jnp.max(scores, axis=-1, keepdims=True)
    p = jnp.exp(scores)
    p = p * pl.reciprocal(jnp.sum(p, axis=-1, keepdims=True), approx=True)
    p = p.reshape(G, S, S).astype(jnp.bfloat16)

    ctx = jnp.einsum('gqk,gkd->gqd', p, v,
                     preferred_element_type=jnp.float32)               # (G, S, hd)
    ctx = ctx.astype(jnp.bfloat16).reshape(Bblk, head_num, S, head_size)
    ctx = jnp.transpose(ctx, (0, 2, 1, 3)).reshape(M, H)               # bf16 (M, H)

    attn = jnp.dot(ctx, wo_ref[0],
                   preferred_element_type=jnp.float32) + bo_ref[0]
    x1 = _layer_norm(attn + x2d, g1_ref[0], be1_ref[0], ln_eps)

    # --- feed-forward (tanh-approx GELU, as FasterTransformer uses) ---
    inter = jnp.dot(x1.astype(jnp.bfloat16), wi_ref[0],
                    preferred_element_type=jnp.float32) + bi_ref[0]
    inter = jax.nn.gelu(inter, approximate=True)
    ffn = jnp.dot(inter.astype(jnp.bfloat16), w2_ref[0],
                  preferred_element_type=jnp.float32) + b2_ref[0]
    y = _layer_norm(ffn + x1, g2_ref[0], be2_ref[0], ln_eps)

    act_ref[...] = y.reshape(Bblk, S, H)           # carry to next layer (stays in VMEM)

    @pl.when(layer == pl.num_programs(1) - 1)
    def _():
        out_ref[...] = y.reshape(Bblk, S, H).astype(out_ref.dtype)


def _pack_layer_weights(layer_weights, head_size):
    """Stack per-layer weights into [L, ...] arrays; bf16 matrices, f32 biases/LN.

    The attention scale 1/sqrt(head_size) is folded into Wq / bq here (one-time
    prep), and Wq/Wk/Wv are fused into a single (H, 3H) matrix.
    """
    scale = 1.0 / math.sqrt(head_size)

    def stack(fn, dtype=None):
        a = jnp.stack([fn(w) for w in layer_weights], axis=0)
        return a.astype(dtype) if dtype is not None else a

    return {
        "wqkv": stack(lambda w: jnp.concatenate(
            [w["wq"] * scale, w["wk"], w["wv"]], axis=1), jnp.bfloat16),
        "bqkv": stack(lambda w: jnp.concatenate(
            [w["bq"] * scale, w["bk"], w["bv"]], axis=1)),
        "wo": stack(lambda w: w["wo"], jnp.bfloat16),
        "bo": stack(lambda w: w["bo"]),
        "g1": stack(lambda w: w["g1"]),
        "be1": stack(lambda w: w["be1"]),
        "wi": stack(lambda w: w["wi"], jnp.bfloat16),
        "bi": stack(lambda w: w["bi"]),
        "w2": stack(lambda w: w["w2"], jnp.bfloat16),
        "b2": stack(lambda w: w["b2"]),
        "g2": stack(lambda w: w["g2"]),
        "be2": stack(lambda w: w["be2"]),
    }


def _pick_batch_block(batch, max_bblk=4, min_batch_steps=2):
    """Largest divisor of `batch` <= max_bblk, preferring >= min_batch_steps grid
    steps along the batch axis so megacore (v7x) keeps both cores busy."""
    divisors = [d for d in range(1, max_bblk + 1) if batch % d == 0]
    good = [d for d in divisors if batch // d >= min_batch_steps]
    return max(good) if good else max(divisors)


def _vmem_limit_bytes():
    """Per-generation scoped VMEM limit: headroom under 64 MiB on v7x, generous on
    v5e/v6e (128 MiB physical)."""
    try:
        kind = jax.devices()[0].device_kind.lower()
    except Exception:
        kind = ""
    if "v7" in kind:
        return 52 * 1024 * 1024
    return 100 * 1024 * 1024


def _cost_estimate(B, S, H, I, L, head_num, n_batch_blocks):
    # matmul flops per layer: QKV + attn-out + 2xFFN + scores/ctx
    matmul_flops = (2 * B * S * H * (3 * H) + 2 * B * S * H * H
                    + 4 * B * S * H * I + 4 * B * S * S * H)
    flops = L * (matmul_flops + 12 * B * S * H)          # + elementwise slack
    transcendentals = L * B * (head_num * S * S + S * I)  # softmax exp + gelu tanh
    weight_bytes_per_layer = 2 * (3 * H * H + H * H + 2 * H * I)  # bf16 matrices
    bytes_accessed = (L * weight_bytes_per_layer * n_batch_blocks
                      + 2 * B * S * H * 4 + B * S * S * 4)
    return pl.CostEstimate(flops=int(flops),
                           transcendentals=int(transcendentals),
                           bytes_accessed=int(bytes_accessed))


def _encoder_stack(x, add_mask, pw, head_num, head_size, ln_eps):
    B, S, H = x.shape
    L = pw["wqkv"].shape[0]
    I = pw["wi"].shape[-1]
    bblk = _pick_batch_block(B)
    n_batch_blocks = B // bblk

    kernel = functools.partial(encoder_stack_kernel, head_num=head_num,
                               head_size=head_size, ln_eps=ln_eps)

    def wspec(shape):
        nd = len(shape)
        # weight blocks vary along the layer axis -> default double-buffering
        # prefetches the next layer's weights behind the current layer's compute.
        return pl.BlockSpec((1,) + shape, lambda b, l, _n=nd: (l,) + (0,) * _n)

    in_specs = [
        pl.BlockSpec((bblk, S, H), lambda b, l: (b, 0, 0)),   # hidden states
        pl.BlockSpec((bblk, S, S), lambda b, l: (b, 0, 0)),   # additive attention mask
        wspec((H, 3 * H)), wspec((1, 3 * H)),                 # fused QKV W, b
        wspec((H, H)), wspec((1, H)),                         # attn output W, b
        wspec((1, H)), wspec((1, H)),                         # LN1 gamma, beta
        wspec((H, I)), wspec((1, I)),                         # intermediate W, b
        wspec((I, H)), wspec((1, H)),                         # FFN output W, b
        wspec((1, H)), wspec((1, H)),                         # LN2 gamma, beta
    ]
    args = [x, add_mask,
            pw["wqkv"], pw["bqkv"], pw["wo"], pw["bo"], pw["g1"], pw["be1"],
            pw["wi"], pw["bi"], pw["w2"], pw["b2"], pw["g2"], pw["be2"]]

    return pl.pallas_call(
        kernel,
        out_shape=jax.ShapeDtypeStruct((B, S, H), x.dtype),
        grid_spec=pltpu.PrefetchScalarGridSpec(
            num_scalar_prefetch=0,
            grid=(n_batch_blocks, L),
            in_specs=in_specs,
            out_specs=pl.BlockSpec((bblk, S, H), lambda b, l: (b, 0, 0)),
            scratch_shapes=[pltpu.VMEM((bblk, S, H), jnp.float32)],
        ),
        compiler_params=pltpu.CompilerParams(
            dimension_semantics=("parallel", "arbitrary"),
            vmem_limit_bytes=_vmem_limit_bytes(),
        ),
        cost_estimate=_cost_estimate(B, S, H, I, L, head_num, n_batch_blocks),
    )(*args)


def custom_encoder_forward(hidden_states, attention_mask, sequence_lengths,
                           layer_weights, head_num, head_size, ln_eps=1e-6):
    """Mirrors CustomEncoder.forward with remove_padding=False, int8_mode=0.

    Note: LayerNorm eps follows FasterTransformer (1e-6); HF BERT uses 1e-12 —
    pass ln_eps if bit-level parity with a different reference is needed.
    """
    B, S, H = hidden_states.shape

    # trt_seq_len bookkeeping (metadata only for the TRT fused kernels; the dense
    # non-remove-padding output does not depend on it).
    padding_offset = jnp.arange(0, B * S, S, dtype=sequence_lengths.dtype)
    seq_off_with_pad = sequence_lengths + padding_offset
    c = jnp.concatenate([padding_offset, seq_off_with_pad], axis=0)
    t = jnp.transpose(jnp.reshape(c, (2, -1)), (1, 0))
    trt_seq_len = jnp.concatenate(
        [jnp.reshape(t, (-1,)),
         jnp.array([B * S], dtype=t.dtype)], axis=0).astype(jnp.int32)
    del trt_seq_len  # not consumed by the dense compute path

    # Precompute the FasterTransformer-style additive mask once (instead of L times
    # per batch element inside the kernel).
    add_mask = (1.0 - attention_mask.astype(jnp.float32)) * (-10000.0)

    packed = _pack_layer_weights(layer_weights, head_size)
    out = _encoder_stack(hidden_states, add_mask, packed,
                         head_num, head_size, ln_eps)
    return (out,)


def _init_layer_weights(key, hidden, intermediate):
    ks = jax.random.split(key, 8)
    std = 0.02
    return {
        "wq": std * jax.random.normal(ks[0], (hidden, hidden), jnp.float32),
        "bq": jnp.zeros((1, hidden), jnp.float32),
        "wk": std * jax.random.normal(ks[1], (hidden, hidden), jnp.float32),
        "bk": jnp.zeros((1, hidden), jnp.float32),
        "wv": std * jax.random.normal(ks[2], (hidden, hidden), jnp.float32),
        "bv": jnp.zeros((1, hidden), jnp.float32),
        "wo": std * jax.random.normal(ks[3], (hidden, hidden), jnp.float32),
        "bo": jnp.zeros((1, hidden), jnp.float32),
        "g1": jnp.ones((1, hidden), jnp.float32),
        "be1": jnp.zeros((1, hidden), jnp.float32),
        "wi": std * jax.random.normal(ks[4], (hidden, intermediate), jnp.float32),
        "bi": jnp.zeros((1, intermediate), jnp.float32),
        "w2": std * jax.random.normal(ks[5], (intermediate, hidden), jnp.float32),
        "b2": jnp.zeros((1, hidden), jnp.float32),
        "g2": jnp.ones((1, hidden), jnp.float32),
        "be2": jnp.zeros((1, hidden), jnp.float32),
        # TODO(synk): 17th listed weight (int8 amax list) is unused for int8_mode=0.
    }


if __name__ == "__main__":
    layer_num = 2
    head_num = 4
    head_size = 8
    hidden = head_num * head_size          # 32
    intermediate = 4 * hidden              # 128
    batch, seq = 4, 8                      # batch=4 exercises Bblk=2 batch blocking

    key = jax.random.PRNGKey(0)
    k_x, k_w = jax.random.split(key)
    hidden_states = jax.random.normal(k_x, (batch, seq, hidden), jnp.float32)
    sequence_lengths = jnp.array([seq, 5, seq, 3], jnp.int32)

    # attention_mask[b, i, j] = 1.0 if both i and j are within sequence_lengths[b]
    pos = jnp.arange(seq)
    valid = (pos[None, :] < sequence_lengths[:, None]).astype(jnp.float32)  # (B, S)
    attention_mask = valid[:, :, None] * valid[:, None, :]                  # (B, S, S)

    layer_weights = [_init_layer_weights(k, hidden, intermediate)
                     for k in jax.random.split(k_w, layer_num)]

    (out,) = custom_encoder_forward(hidden_states, attention_mask,
                                    sequence_lengths, layer_weights,
                                    head_num, head_size)
    out = jax.block_until_ready(out)
    assert out.shape == (batch, seq, hidden) and out.dtype == jnp.float32
    assert bool(jnp.all(jnp.isfinite(out)))
    print("KERNEL_OK")
</pallas_src>

<mosaic_0001>
module attributes {stable_mosaic.version = 11 : i64} {
  func.func @encoder_stack_kernel(%arg0: i32, %arg1: i32, %arg2: memref<2x8x32xf32, #tpu.memory_space<vmem>>, %arg3: memref<2x8x8xf32, #tpu.memory_space<vmem>>, %arg4: memref<1x32x96xbf16, #tpu.memory_space<vmem>>, %arg5: memref<1x1x96xf32, #tpu.memory_space<vmem>>, %arg6: memref<1x32x32xbf16, #tpu.memory_space<vmem>>, %arg7: memref<1x1x32xf32, #tpu.memory_space<vmem>>, %arg8: memref<1x1x32xf32, #tpu.memory_space<vmem>>, %arg9: memref<1x1x32xf32, #tpu.memory_space<vmem>>, %arg10: memref<1x32x128xbf16, #tpu.memory_space<vmem>>, %arg11: memref<1x1x128xf32, #tpu.memory_space<vmem>>, %arg12: memref<1x128x32xbf16, #tpu.memory_space<vmem>>, %arg13: memref<1x1x32xf32, #tpu.memory_space<vmem>>, %arg14: memref<1x1x32xf32, #tpu.memory_space<vmem>>, %arg15: memref<1x1x32xf32, #tpu.memory_space<vmem>>, %arg16: memref<2x8x32xf32, #tpu.memory_space<vmem>>, %arg17: memref<2x8x32xf32, #tpu.memory_space<vmem>>) attributes {dimension_semantics = [#tpu.dimension_semantics<parallel>, #tpu.dimension_semantics<arbitrary>], iteration_bounds = array<i64: 2, 2>, scalar_prefetch = 0 : i64, scratch_operands = 1 : i64, tpu.core_type = #tpu.core_type<tc>, window_params = [{transform_indices = @transform_0, window_bounds = array<i64: 2, 8, 32>}, {transform_indices = @transform_1, window_bounds = array<i64: 2, 8, 8>}, {transform_indices = @transform_2, window_bounds = array<i64: 1, 32, 96>}, {transform_indices = @transform_3, window_bounds = array<i64: 1, 1, 96>}, {transform_indices = @transform_4, window_bounds = array<i64: 1, 32, 32>}, {transform_indices = @transform_5, window_bounds = array<i64: 1, 1, 32>}, {transform_indices = @transform_6, window_bounds = array<i64: 1, 1, 32>}, {transform_indices = @transform_7, window_bounds = array<i64: 1, 1, 32>}, {transform_indices = @transform_8, window_bounds = array<i64: 1, 32, 128>}, {transform_indices = @transform_9, window_bounds = array<i64: 1, 1, 128>}, {transform_indices = @transform_10, window_bounds = array<i64: 1, 128, 32>}, {transform_indices = @transform_11, window_bounds = array<i64: 1, 1, 32>}, {transform_indices = @transform_12, window_bounds = array<i64: 1, 1, 32>}, {transform_indices = @transform_13, window_bounds = array<i64: 1, 1, 32>}, {transform_indices = @transform_14, window_bounds = array<i64: 2, 8, 32>}]} {
    %c0_i32 = arith.constant 0 : i32
    %0 = arith.cmpi eq, %arg1, %c0_i32 : i32
    %1 = arith.extui %0 : i1 to i32
    %c0_i32_0 = arith.constant 0 : i32
    %2 = arith.cmpi ne, %1, %c0_i32_0 : i32
    scf.if %2 {
      %c0_67 = arith.constant 0 : index
      %c0_68 = arith.constant 0 : index
      %c0_69 = arith.constant 0 : index
      %146 = vector.load %arg2[%c0_67, %c0_68, %c0_69] : memref<2x8x32xf32, #tpu.memory_space<vmem>>, vector<2x8x32xf32>
      %c0_70 = arith.constant 0 : index
      %c0_71 = arith.constant 0 : index
      %c0_72 = arith.constant 0 : index
      %147 = vector.load %arg17[%c0_70, %c0_71, %c0_72] : memref<2x8x32xf32, #tpu.memory_space<vmem>>, vector<2x8x32xf32>
      tpu.vector_store %arg17[%c0_70, %c0_71, %c0_72], %146 {strides = array<i32>} : memref<2x8x32xf32, #tpu.memory_space<vmem>>, vector<2x8x32xf32>,
    } else {
    }
    %c0 = arith.constant 0 : index
    %c0_1 = arith.constant 0 : index
    %c0_2 = arith.constant 0 : index
    %3 = vector.load %arg17[%c0, %c0_1, %c0_2] : memref<2x8x32xf32, #tpu.memory_space<vmem>>, vector<2x8x32xf32>
    %4 = vector.shape_cast %3 : vector<2x8x32xf32> to vector<16x32xf32>
    %5 = arith.truncf %4 : vector<16x32xf32> to vector<16x32xbf16>
    %c0_3 = arith.constant 0 : index
    %c0_4 = arith.constant 0 : index
    %c0_5 = arith.constant 0 : index
    %6 = vector.load %arg4[%c0_3, %c0_4, %c0_5] : memref<1x32x96xbf16, #tpu.memory_space<vmem>>, vector<1x32x96xbf16>
    %7 = vector.shape_cast %6 : vector<1x32x96xbf16> to vector<32x96xbf16>
    %cst = arith.constant dense<0.000000e+00> : vector<16x96xf32>
    %8 = tpu.matmul %5, %7, %cst {dimension_numbers = #tpu.dot_dimension_numbers<[1], [0], [0], [1], [0, 0, 1, 1], [], []>} : vector<16x32xbf16>, vector<32x96xbf16>, vector<16x96xf32> -> vector<16x96xf32>
    %c0_6 = arith.constant 0 : index
    %c0_7 = arith.constant 0 : index
    %c0_8 = arith.constant 0 : index
    %9 = vector.load %arg5[%c0_6, %c0_7, %c0_8] : memref<1x1x96xf32, #tpu.memory_space<vmem>>, vector<1x1x96xf32>
    %10 = vector.shape_cast %9 : vector<1x1x96xf32> to vector<1x96xf32>
    %11 = vector.broadcast %10 : vector<1x96xf32> to vector<16x96xf32>
    %12 = arith.addf %8, %11 : vector<16x96xf32>
    %13 = vector.extract_strided_slice %12 {offsets = [0, 0], sizes = [16, 32], strides = [1, 1]} : vector<16x96xf32> to vector<16x32xf32>
    %14 = arith.truncf %13 : vector<16x32xf32> to vector<16x32xbf16>
    %15 = vector.shape_cast %14 : vector<16x32xbf16> to vector<2x8x4x8xbf16>
    %16 = tpu.transpose %15, [0, 2, 1, 3] : vector<2x8x4x8xbf16> -> vector<2x4x8x8xbf16>
    %17 = vector.shape_cast %16 : vector<2x4x8x8xbf16> to vector<8x8x8xbf16>
    %18 = vector.extract_strided_slice %12 {offsets = [0, 32], sizes = [16, 32], strides = [1, 1]} : vector<16x96xf32> to vector<16x32xf32>
    %19 = arith.truncf %18 : vector<16x32xf32> to vector<16x32xbf16>
    %20 = vector.shape_cast %19 : vector<16x32xbf16> to vector<2x8x4x8xbf16>
    %21 = tpu.transpose %20, [0, 2, 1, 3] : vector<2x8x4x8xbf16> -> vector<2x4x8x8xbf16>
    %22 = vector.shape_cast %21 : vector<2x4x8x8xbf16> to vector<8x8x8xbf16>
    %23 = vector.extract_strided_slice %12 {offsets = [0, 64], sizes = [16, 32], strides = [1, 1]} : vector<16x96xf32> to vector<16x32xf32>
    %24 = arith.truncf %23 : vector<16x32xf32> to vector<16x32xbf16>
    %25 = vector.shape_cast %24 : vector<16x32xbf16> to vector<2x8x4x8xbf16>
    %26 = tpu.transpose %25, [0, 2, 1, 3] : vector<2x8x4x8xbf16> -> vector<2x4x8x8xbf16>
    %27 = vector.shape_cast %26 : vector<2x4x8x8xbf16> to vector<8x8x8xbf16>
    %c0_9 = arith.constant 0 : index
    %c0_10 = arith.constant 0 : index
    %c0_11 = arith.constant 0 : index
    %28 = vector.load %arg3[%c0_9, %c0_10, %c0_11] : memref<2x8x8xf32, #tpu.memory_space<vmem>>, vector<2x8x8xf32>
    "tpu.trace_start"() <{level = 10 : i32, message = "gqd,gkd->gqk"}> : () -> ()
    %cst_12 = arith.constant dense<0.000000e+00> : vector<8x8x8xf32>
    %29 = tpu.matmul %17, %22, %cst_12 {dimension_numbers = #tpu.dot_dimension_numbers<[2], [2], [1], [1], [0, 0, 0, 1, 1, 1], [0], [0]>} : vector<8x8x8xbf16>, vector<8x8x8xbf16>, vector<8x8x8xf32> -> vector<8x8x8xf32>
    "tpu.trace_stop"() : () -> ()
    %30 = vector.shape_cast %29 : vector<8x8x8xf32> to vector<2x4x8x8xf32>
    %31 = vector.shape_cast %28 : vector<2x8x8xf32> to vector<2x1x8x8xf32>
    %32 = vector.broadcast %31 : vector<2x1x8x8xf32> to vector<2x4x8x8xf32>
    %33 = arith.addf %30, %32 : vector<2x4x8x8xf32>
    %cst_13 = arith.constant dense<0xFF800000> : vector<2x4x8xf32>
    %34 = vector.multi_reduction <maximumf>, %33, %cst_13 [3] : vector<2x4x8x8xf32> to vector<2x4x8xf32>
    %35 = vector.shape_cast %34 : vector<2x4x8xf32> to vector<2x4x8x1xf32>
    %36 = vector.broadcast %35 : vector<2x4x8x1xf32> to vector<2x4x8x8xf32>
    %37 = arith.subf %33, %36 : vector<2x4x8x8xf32>
    %38 = math.exp %37 : vector<2x4x8x8xf32>
    %cst_14 = arith.constant dense<0.000000e+00> : vector<2x4x8xf32>
    %39 = vector.multi_reduction <add>, %38, %cst_14 [3] : vector<2x4x8x8xf32> to vector<2x4x8xf32>
    %40 = vector.shape_cast %39 : vector<2x4x8xf32> to vector<2x4x8x1xf32>
    %41 = tpu.reciprocal %40 {approx = true} : vector<2x4x8x1xf32> -> vector<2x4x8x1xf32>
    %42 = vector.broadcast %41 : vector<2x4x8x1xf32> to vector<2x4x8x8xf32>
    %43 = arith.mulf %38, %42 : vector<2x4x8x8xf32>
    %44 = vector.shape_cast %43 : vector<2x4x8x8xf32> to vector<8x8x8xf32>
    %45 = arith.truncf %44 : vector<8x8x8xf32> to vector<8x8x8xbf16>
    "tpu.trace_start"() <{level = 10 : i32, message = "gqk,gkd->gqd"}> : () -> ()
    %cst_15 = arith.constant dense<0.000000e+00> : vector<8x8x8xf32>
    %46 = tpu.matmul %45, %27, %cst_15 {dimension_numbers = #tpu.dot_dimension_numbers<[2], [1], [1], [2], [0, 0, 0, 1, 1, 2], [0], [0]>} : vector<8x8x8xbf16>, vector<8x8x8xbf16>, vector<8x8x8xf32> -> vector<8x8x8xf32>
    "tpu.trace_stop"() : () -> ()
    %47 = arith.truncf %46 : vector<8x8x8xf32> to vector<8x8x8xbf16>
    %48 = vector.shape_cast %47 : vector<8x8x8xbf16> to vector<2x4x8x8xbf16>
    %49 = tpu.transpose %48, [0, 2, 1, 3] : vector<2x4x8x8xbf16> -> vector<2x8x4x8xbf16>
    %50 = vector.shape_cast %49 : vector<2x8x4x8xbf16> to vector<16x32xbf16>
    %c0_16 = arith.constant 0 : index
    %c0_17 = arith.constant 0 : index
    %c0_18 = arith.constant 0 : index
    %51 = vector.load %arg6[%c0_16, %c0_17, %c0_18] : memref<1x32x32xbf16, #tpu.memory_space<vmem>>, vector<1x32x32xbf16>
    %52 = vector.shape_cast %51 : vector<1x32x32xbf16> to vector<32x32xbf16>
    %cst_19 = arith.constant dense<0.000000e+00> : vector<16x32xf32>
    %53 = tpu.matmul %50, %52, %cst_19 {dimension_numbers = #tpu.dot_dimension_numbers<[1], [0], [0], [1], [0, 0, 1, 1], [], []>} : vector<16x32xbf16>, vector<32x32xbf16>, vector<16x32xf32> -> vector<16x32xf32>
    %c0_20 = arith.constant 0 : index
    %c0_21 = arith.constant 0 : index
    %c0_22 = arith.constant 0 : index
    %54 = vector.load %arg7[%c0_20, %c0_21, %c0_22] : memref<1x1x32xf32, #tpu.memory_space<vmem>>, vector<1x1x32xf32>
    %55 = vector.shape_cast %54 : vector<1x1x32xf32> to vector<1x32xf32>
    %56 = vector.broadcast %55 : vector<1x32xf32> to vector<16x32xf32>
    %57 = arith.addf %53, %56 : vector<16x32xf32>
    %58 = arith.addf %57, %4 : vector<16x32xf32>
    %c0_23 = arith.constant 0 : index
    %c0_24 = arith.constant 0 : index
    %c0_25 = arith.constant 0 : index
    %59 = vector.load %arg8[%c0_23, %c0_24, %c0_25] : memref<1x1x32xf32, #tpu.memory_space<vmem>>, vector<1x1x32xf32>
    %60 = vector.shape_cast %59 : vector<1x1x32xf32> to vector<1x32xf32>
    %c0_26 = arith.constant 0 : index
    %c0_27 = arith.constant 0 : index
    %c0_28 = arith.constant 0 : index
    %61 = vector.load %arg9[%c0_26, %c0_27, %c0_28] : memref<1x1x32xf32, #tpu.memory_space<vmem>>, vector<1x1x32xf32>
    %62 = vector.shape_cast %61 : vector<1x1x32xf32> to vector<1x32xf32>
    %cst_29 = arith.constant dense<0.000000e+00> : vector<16xf32>
    %63 = vector.multi_reduction <add>, %58, %cst_29 [1] : vector<16x32xf32> to vector<16xf32>
    %64 = vector.shape_cast %63 : vector<16xf32> to vector<16x1xf32>
    %cst_30 = arith.constant 3.200000e+01 : f32
    %65 = vector.broadcast %cst_30 : f32 to vector<16x1xf32>
    %66 = arith.divf %64, %65 : vector<16x1xf32>
    %67 = vector.broadcast %66 : vector<16x1xf32> to vector<16x32xf32>
    %68 = arith.subf %58, %67 : vector<16x32xf32>
    %69 = arith.mulf %68, %68 : vector<16x32xf32>
    %cst_31 = arith.constant dense<0.000000e+00> : vector<16xf32>
    %70 = vector.multi_reduction <add>, %69, %cst_31 [1] : vector<16x32xf32> to vector<16xf32>
    %71 = vector.shape_cast %70 : vector<16xf32> to vector<16x1xf32>
    %cst_32 = arith.constant 3.200000e+01 : f32
    %72 = vector.broadcast %cst_32 : f32 to vector<16x1xf32>
    %73 = arith.divf %71, %72 : vector<16x1xf32>
    %74 = vector.broadcast %66 : vector<16x1xf32> to vector<16x32xf32>
    %75 = arith.subf %58, %74 : vector<16x32xf32>
    %cst_33 = arith.constant 9.99999997E-7 : f32
    %76 = vector.broadcast %cst_33 : f32 to vector<16x1xf32>
    %77 = arith.addf %73, %76 : vector<16x1xf32>
    %78 = math.rsqrt %77 : vector<16x1xf32>
    %79 = vector.broadcast %78 : vector<16x1xf32> to vector<16x32xf32>
    %80 = arith.mulf %75, %79 : vector<16x32xf32>
    %81 = vector.broadcast %60 : vector<1x32xf32> to vector<16x32xf32>
    %82 = arith.mulf %80, %81 : vector<16x32xf32>
    %83 = vector.broadcast %62 : vector<1x32xf32> to vector<16x32xf32>
    %84 = arith.addf %82, %83 : vector<16x32xf32>
    %85 = arith.truncf %84 : vector<16x32xf32> to vector<16x32xbf16>
    %c0_34 = arith.constant 0 : index
    %c0_35 = arith.constant 0 : index
    %c0_36 = arith.constant 0 : index
    %86 = vector.load %arg10[%c0_34, %c0_35, %c0_36] : memref<1x32x128xbf16, #tpu.memory_space<vmem>>, vector<1x32x128xbf16>
    %87 = vector.shape_cast %86 : vector<1x32x128xbf16> to vector<32x128xbf16>
    %cst_37 = arith.constant dense<0.000000e+00> : vector<16x128xf32>
    %88 = tpu.matmul %85, %87, %cst_37 {dimension_numbers = #tpu.dot_dimension_numbers<[1], [0], [0], [1], [0, 0, 1, 1], [], []>} : vector<16x32xbf16>, vector<32x128xbf16>, vector<16x128xf32> -> vector<16x128xf32>
    %c0_38 = arith.constant 0 : index
    %c0_39 = arith.constant 0 : index
    %c0_40 = arith.constant 0 : index
    %89 = vector.load %arg11[%c0_38, %c0_39, %c0_40] : memref<1x1x128xf32, #tpu.memory_space<vmem>>, vector<1x1x128xf32>
    %90 = vector.shape_cast %89 : vector<1x1x128xf32> to vector<1x128xf32>
    %91 = vector.broadcast %90 : vector<1x128xf32> to vector<16x128xf32>
    %92 = arith.addf %88, %91 : vector<16x128xf32>
    %93 = arith.mulf %92, %92 : vector<16x128xf32>
    %94 = arith.mulf %92, %93 : vector<16x128xf32>
    %cst_41 = arith.constant 4.471500e-02 : f32
    %95 = vector.broadcast %cst_41 : f32 to vector<16x128xf32>
    %96 = arith.mulf %95, %94 : vector<16x128xf32>
    %97 = arith.addf %92, %96 : vector<16x128xf32>
    %cst_42 = arith.constant 0.797884583 : f32
    %98 = vector.broadcast %cst_42 : f32 to vector<16x128xf32>
    %99 = arith.mulf %98, %97 : vector<16x128xf32>
    %100 = math.tanh %99 : vector<16x128xf32>
    %cst_43 = arith.constant 1.000000e+00 : f32
    %101 = vector.broadcast %cst_43 : f32 to vector<16x128xf32>
    %102 = arith.addf %101, %100 : vector<16x128xf32>
    %cst_44 = arith.constant 5.000000e-01 : f32
    %103 = vector.broadcast %cst_44 : f32 to vector<16x128xf32>
    %104 = arith.mulf %103, %102 : vector<16x128xf32>
    %105 = arith.mulf %92, %104 : vector<16x128xf32>
    %106 = arith.truncf %105 : vector<16x128xf32> to vector<16x128xbf16>
    %c0_45 = arith.constant 0 : index
    %c0_46 = arith.constant 0 : index
    %c0_47 = arith.constant 0 : index
    %107 = vector.load %arg12[%c0_45, %c0_46, %c0_47] : memref<1x128x32xbf16, #tpu.memory_space<vmem>>, vector<1x128x32xbf16>
    %108 = vector.shape_cast %107 : vector<1x128x32xbf16> to vector<128x32xbf16>
    %cst_48 = arith.constant dense<0.000000e+00> : vector<16x32xf32>
    %109 = tpu.matmul %106, %108, %cst_48 {dimension_numbers = #tpu.dot_dimension_numbers<[1], [0], [0], [1], [0, 0, 1, 1], [], []>} : vector<16x128xbf16>, vector<128x32xbf16>, vector<16x32xf32> -> vector<16x32xf32>
    %c0_49 = arith.constant 0 : index
    %c0_50 = arith.constant 0 : index
    %c0_51 = arith.constant 0 : index
    %110 = vector.load %arg13[%c0_49, %c0_50, %c0_51] : memref<1x1x32xf32, #tpu.memory_space<vmem>>, vector<1x1x32xf32>
    %111 = vector.shape_cast %110 : vector<1x1x32xf32> to vector<1x32xf32>
    %112 = vector.broadcast %111 : vector<1x32xf32> to vector<16x32xf32>
    %113 = arith.addf %109, %112 : vector<16x32xf32>
    %114 = arith.addf %113, %84 : vector<16x32xf32>
    %c0_52 = arith.constant 0 : index
    %c0_53 = arith.constant 0 : index
    %c0_54 = arith.constant 0 : index
    %115 = vector.load %arg14[%c0_52, %c0_53, %c0_54] : memref<1x1x32xf32, #tpu.memory_space<vmem>>, vector<1x1x32xf32>
    %116 = vector.shape_cast %115 : vector<1x1x32xf32> to vector<1x32xf32>
    %c0_55 = arith.constant 0 : index
    %c0_56 = arith.constant 0 : index
    %c0_57 = arith.constant 0 : index
    %117 = vector.load %arg15[%c0_55, %c0_56, %c0_57] : memref<1x1x32xf32, #tpu.memory_space<vmem>>, vector<1x1x32xf32>
    %118 = vector.shape_cast %117 : vector<1x1x32xf32> to vector<1x32xf32>
    %cst_58 = arith.constant dense<0.000000e+00> : vector<16xf32>
    %119 = vector.multi_reduction <add>, %114, %cst_58 [1] : vector<16x32xf32> to vector<16xf32>
    %120 = vector.shape_cast %119 : vector<16xf32> to vector<16x1xf32>
    %cst_59 = arith.constant 3.200000e+01 : f32
    %121 = vector.broadcast %cst_59 : f32 to vector<16x1xf32>
    %122 = arith.divf %120, %121 : vector<16x1xf32>
    %123 = vector.broadcast %122 : vector<16x1xf32> to vector<16x32xf32>
    %124 = arith.subf %114, %123 : vector<16x32xf32>
    %125 = arith.mulf %124, %124 : vector<16x32xf32>
    %cst_60 = arith.constant dense<0.000000e+00> : vector<16xf32>
    %126 = vector.multi_reduction <add>, %125, %cst_60 [1] : vector<16x32xf32> to vector<16xf32>
    %127 = vector.shape_cast %126 : vector<16xf32> to vector<16x1xf32>
    %cst_61 = arith.constant 3.200000e+01 : f32
    %128 = vector.broadcast %cst_61 : f32 to vector<16x1xf32>
    %129 = arith.divf %127, %128 : vector<16x1xf32>
    %130 = vector.broadcast %122 : vector<16x1xf32> to vector<16x32xf32>
    %131 = arith.subf %114, %130 : vector<16x32xf32>
    %cst_62 = arith.constant 9.99999997E-7 : f32
    %132 = vector.broadcast %cst_62 : f32 to vector<16x1xf32>
    %133 = arith.addf %129, %132 : vector<16x1xf32>
    %134 = math.rsqrt %133 : vector<16x1xf32>
    %135 = vector.broadcast %134 : vector<16x1xf32> to vector<16x32xf32>
    %136 = arith.mulf %131, %135 : vector<16x32xf32>
    %137 = vector.broadcast %116 : vector<1x32xf32> to vector<16x32xf32>
    %138 = arith.mulf %136, %137 : vector<16x32xf32>
    %139 = vector.broadcast %118 : vector<1x32xf32> to vector<16x32xf32>
    %140 = arith.addf %138, %139 : vector<16x32xf32>
    %141 = vector.shape_cast %140 : vector<16x32xf32> to vector<2x8x32xf32>
    %c0_63 = arith.constant 0 : index
    %c0_64 = arith.constant 0 : index
    %c0_65 = arith.constant 0 : index
    %142 = vector.load %arg17[%c0_63, %c0_64, %c0_65] : memref<2x8x32xf32, #tpu.memory_space<vmem>>, vector<2x8x32xf32>
    tpu.vector_store %arg17[%c0_63, %c0_64, %c0_65], %141 {strides = array<i32>} : memref<2x8x32xf32, #tpu.memory_space<vmem>>, vector<2x8x32xf32>,
    %c1_i32 = arith.constant 1 : i32
    %143 = arith.cmpi eq, %arg1, %c1_i32 : i32
    %144 = arith.extui %143 : i1 to i32
    %c0_i32_66 = arith.constant 0 : i32
    %145 = arith.cmpi ne, %144, %c0_i32_66 : i32
    scf.if %145 {
      %146 = vector.shape_cast %140 : vector<16x32xf32> to vector<2x8x32xf32>
      %c0_67 = arith.constant 0 : index
      %c0_68 = arith.constant 0 : index
      %c0_69 = arith.constant 0 : index
      %147 = vector.load %arg16[%c0_67, %c0_68, %c0_69] : memref<2x8x32xf32, #tpu.memory_space<vmem>>, vector<2x8x32xf32>
      tpu.vector_store %arg16[%c0_67, %c0_68, %c0_69], %146 {strides = array<i32>} : memref<2x8x32xf32, #tpu.memory_space<vmem>>, vector<2x8x32xf32>,
    } else {
    }
    return
  }
  func.func @transform_0(%arg0: i32, %arg1: i32) -> (i32, i32, i32) {
    %c0_i32 = arith.constant 0 : i32
    %c0_i32_0 = arith.constant 0 : i32
    %c0_i32_1 = arith.constant 0 : i32
    return %arg0, %c0_i32, %c0_i32_0 : i32, i32, i32
  }
  func.func @transform_1(%arg0: i32, %arg1: i32) -> (i32, i32, i32) {
    %c0_i32 = arith.constant 0 : i32
    %c0_i32_0 = arith.constant 0 : i32
    %c0_i32_1 = arith.constant 0 : i32
    return %arg0, %c0_i32, %c0_i32_0 : i32, i32, i32
  }
  func.func @transform_2(%arg0: i32, %arg1: i32) -> (i32, i32, i32) {
    %c0_i32 = arith.constant 0 : i32
    %c0_i32_0 = arith.constant 0 : i32
    %c0_i32_1 = arith.constant 0 : i32
    return %arg1, %c0_i32, %c0_i32_0 : i32, i32, i32
  }
  func.func @transform_3(%arg0: i32, %arg1: i32) -> (i32, i32, i32) {
    %c0_i32 = arith.constant 0 : i32
    %c0_i32_0 = arith.constant 0 : i32
    %c0_i32_1 = arith.constant 0 : i32
    return %arg1, %c0_i32, %c0_i32_0 : i32, i32, i32
  }
  func.func @transform_4(%arg0: i32, %arg1: i32) -> (i32, i32, i32) {
    %c0_i32 = arith.constant 0 : i32
    %c0_i32_0 = arith.constant 0 : i32
    %c0_i32_1 = arith.constant 0 : i32
    return %arg1, %c0_i32, %c0_i32_0 : i32, i32, i32
  }
  func.func @transform_5(%arg0: i32, %arg1: i32) -> (i32, i32, i32) {
    %c0_i32 = arith.constant 0 : i32
    %c0_i32_0 = arith.constant 0 : i32
    %c0_i32_1 = arith.constant 0 : i32
    return %arg1, %c0_i32, %c0_i32_0 : i32, i32, i32
  }
  func.func @transform_6(%arg0: i32, %arg1: i32) -> (i32, i32, i32) {
    %c0_i32 = arith.constant 0 : i32
    %c0_i32_0 = arith.constant 0 : i32
    %c0_i32_1 = arith.constant 0 : i32
    return %arg1, %c0_i32, %c0_i32_0 : i32, i32, i32
  }
  func.func @transform_7(%arg0: i32, %arg1: i32) -> (i32, i32, i32) {
    %c0_i32 = arith.constant 0 : i32
    %c0_i32_0 = arith.constant 0 : i32
    %c0_i32_1 = arith.constant 0 : i32
    return %arg1, %c0_i32, %c0_i32_0 : i32, i32, i32
  }
  func.func @transform_8(%arg0: i32, %arg1: i32) -> (i32, i32, i32) {
    %c0_i32 = arith.constant 0 : i32
    %c0_i32_0 = arith.constant 0 : i32
    %c0_i32_1 = arith.constant 0 : i32
    return %arg1, %c0_i32, %c0_i32_0 : i32, i32, i32
  }
  func.func @transform_9(%arg0: i32, %arg1: i32) -> (i32, i32, i32) {
    %c0_i32 = arith.constant 0 : i32
    %c0_i32_0 = arith.constant 0 : i32
    %c0_i32_1 = arith.constant 0 : i32
    return %arg1, %c0_i32, %c0_i32_0 : i32, i32, i32
  }
  func.func @transform_10(%arg0: i32, %arg1: i32) -> (i32, i32, i32) {
    %c0_i32 = arith.constant 0 : i32
    %c0_i32_0 = arith.constant 0 : i32
    %c0_i32_1 = arith.constant 0 : i32
    return %arg1, %c0_i32, %c0_i32_0 : i32, i32, i32
  }
  func.func @transform_11(%arg0: i32, %arg1: i32) -> (i32, i32, i32) {
    %c0_i32 = arith.constant 0 : i32
    %c0_i32_0 = arith.constant 0 : i32
    %c0_i32_1 = arith.constant 0 : i32
    return %arg1, %c0_i32, %c0_i32_0 : i32, i32, i32
  }
  func.func @transform_12(%arg0: i32, %arg1: i32) -> (i32, i32, i32) {
    %c0_i32 = arith.constant 0 : i32
    %c0_i32_0 = arith.constant 0 : i32
    %c0_i32_1 = arith.constant 0 : i32
    return %arg1, %c0_i32, %c0_i32_0 : i32, i32, i32
  }
  func.func @transform_13(%arg0: i32, %arg1: i32) -> (i32, i32, i32) {
    %c0_i32 = arith.constant 0 : i32
    %c0_i32_0 = arith.constant 0 : i32
    %c0_i32_1 = arith.constant 0 : i32
    return %arg1, %c0_i32, %c0_i32_0 : i32, i32, i32
  }
  func.func @transform_14(%arg0: i32, %arg1: i32) -> (i32, i32, i32) {
    %c0_i32 = arith.constant 0 : i32
    %c0_i32_0 = arith.constant 0 : i32
    %c0_i32_1 = arith.constant 0 : i32
    return %arg0, %c0_i32, %c0_i32_0 : i32, i32, i32
  }
}

</mosaic_0001>

<llo_original>
// kernel: tpu_custom_call.1
$region0: #{tpu_custom_call.1}
  #allocation0 [shape = 'u32[]', space=smem, size = 0x4, offset = 0x4, fixed_abs, tag = 'smem constant byte address 0x4 - core index']
  #allocation1 [shape = 'u32[72,128]{1,0:T(1,128)}', space=vmem, size = 0x9000, scoped, tag = 'internal scratch']
  #allocation2 [shape = 'f32[2,8,32]{2,1,0:T(8,128)}', space=vmem, size = 0x2000, scoped, tag = 'scratch operand']
  %s0 = inlined_call_operand.vmem [shape: f32[4,8,32], index: 0, kind: input, shape index: {}]
  %s1 = inlined_call_operand.vmem [shape: f32[4,8,8], index: 1, kind: input, shape index: {}]
  %s2 = inlined_call_operand.vmem [shape: bf16[2,32,96], index: 2, kind: input, shape index: {}]
  %s3 = inlined_call_operand.hbm [shape: f32[2,1,96], index: 3, kind: input, shape index: {}]
  %s4 = inlined_call_operand.vmem [shape: bf16[2,32,32], index: 4, kind: input, shape index: {}]
  %s5 = inlined_call_operand.vmem [shape: f32[2,1,32], index: 5, kind: input, shape index: {}]
  %s6 = inlined_call_operand.vmem [shape: f32[2,1,32], index: 6, kind: input, shape index: {}]
  %s7 = inlined_call_operand.hbm [shape: f32[2,1,32], index: 7, kind: input, shape index: {}]
  %s8 = inlined_call_operand.vmem [shape: bf16[2,32,128], index: 8, kind: input, shape index: {}]
  %s9 = inlined_call_operand.vmem [shape: f32[2,1,128], index: 9, kind: input, shape index: {}]
  %s10 = inlined_call_operand.vmem [shape: bf16[2,128,32], index: 10, kind: input, shape index: {}]
  %s11 = inlined_call_operand.vmem [shape: f32[2,1,32], index: 11, kind: input, shape index: {}]
  %s12 = inlined_call_operand.vmem [shape: f32[2,1,32], index: 12, kind: input, shape index: {}]
  %s13 = inlined_call_operand.hbm [shape: f32[2,1,32], index: 13, kind: input, shape index: {}]
  %s14 = inlined_call_operand.hbm [shape: f32[4,8,32], index: 14, kind: output, shape index: {}]
  %s15 = sld [smem:[#allocation0]]
  $region109: #{tpu_custom_call.1} parent=0
    _
  %s17 = ssub.s32 1, %s15
  %s18 = scalar_select 0, %s17, %s15
  $region1: #{tpu_custom_call.1} parent=0
    #allocation3 [shape = 'u8[1024]{0}', space=vmem, size = 0x400, scoped, tag = 'input window, operand 3']
    #allocation4 [shape = 's32[2]{0}', space=sflag, size = 0x8, scoped, tag = 'scoped memory for tpu_custom_call.1']
    #allocation5 [shape = 's32[2]{0}', space=sflag, size = 0x8, scoped, tag = 'scoped memory for tpu_custom_call.1']
    #allocation6 [shape = 'u8[1024]{0}', space=vmem, size = 0x400, scoped, tag = 'input window, operand 7']
    #allocation7 [shape = 's32[2]{0}', space=sflag, size = 0x8, scoped, tag = 'scoped memory for tpu_custom_call.1']
    #allocation8 [shape = 'u8[1024]{0}', space=vmem, size = 0x400, scoped, tag = 'input window, operand 13']
    #allocation9 [shape = 'u8[16384]{0}', space=vmem, size = 0x4000, scoped, tag = 'output window, operand 0']
    %19 = vsyncpa [#allocation4], 0
    %s20 = scalar_lea.sflag [#allocation4], 1
    %21 = vsyncpa %s20, 0
    %22 = vsyncpa [#allocation7], 0
    %s23 = scalar_lea.sflag [#allocation7], 1
    %24 = vsyncpa %s23, 0
    %25 = vsyncpa [#allocation5], 0
    %s26 = scalar_lea.sflag [#allocation5], 1
    %27 = vsyncpa %s26, 0
    loop: start=0, step=1, limit=6
    $region2: #{tpu_custom_call.1} parent=1 // loop_pre_header
      _
    $region3: #{tpu_custom_call.1} parent=1 // loop_header
      %s29 = sphi 0, %s33
      %p30 = scmp.ge.s32.totalorder %s29, 6
      %s36 = sphi 0, %s48
      %s37 = sphi 0, %s44
      %s38 = sphi 0, %s36
      %s39 = sphi 0, %s37
      %s40 = sphi 0, %s38
      %s41 = sphi 0, %s39
      %s51 = sphi 0, %s53
      %s54 = sphi 0, %s51
      %s55 = sphi 0, %s54
      %s71 = sphi 0, %s55
      %s77 = sphi 0, %s79
      %s80 = sphi 0, %s77
      %s81 = sphi 0, %s80
      %s97 = sphi 0, %s81
      %s103 = sphi 0, %s105
      %s106 = sphi 0, %s103
      %s107 = sphi 0, %s106
      %s123 = sphi 0, %s107
      %s129 = sphi 0, %s131
      %s132 = sphi 0, %s129
      %s133 = sphi 0, %s132
      %s149 = sphi 0, %s133
      %s155 = sphi 0, %s157
      %s158 = sphi 0, %s155
      %s159 = sphi 0, %s158
      %s175 = sphi 0, %s159
      %s181 = sphi 0, %s183
      %s184 = sphi 0, %s181
      %s185 = sphi 0, %s184
      %s201 = sphi 0, %s185
      %s207 = sphi 0, %s209
      %s210 = sphi 0, %s207
      %s211 = sphi 0, %s210
      %s227 = sphi 0, %s211
      %s233 = sphi 0, %s235
      %s236 = sphi 0, %s233
      %s237 = sphi 0, %s236
      %s253 = sphi 0, %s237
      %s259 = sphi 0, %s261
      %s262 = sphi 0, %s259
      %s263 = sphi 0, %s262
      %s279 = sphi 0, %s263
      %s285 = sphi 0, %s287
      %s288 = sphi 0, %s285
      %s289 = sphi 0, %s288
      %s305 = sphi 0, %s289
      %s311 = sphi 0, %s313
      %s314 = sphi 0, %s311
      %s315 = sphi 0, %s314
      %s331 = sphi 0, %s315
      %s337 = sphi 0, %s339
      %s340 = sphi 0, %s337
      %s341 = sphi 0, %s340
      %s357 = sphi 0, %s341
      %s363 = sphi 0, %s365
      %s366 = sphi 0, %s363
      %s367 = sphi 0, %s366
      %s383 = sphi 0, %s367
      %s389 = sphi 0, %s391
      %s392 = sphi 0, %s389
      %s393 = sphi 0, %s392
      %s409 = sphi 0, %s393
      %s415 = sphi 0, %s417
      %s418 = sphi 0, %s415
      %s419 = sphi 0, %s418
      %s435 = sphi 0, %s419
    $region4: #{tpu_custom_call.1} parent=1 // loop_header_branch
      %32 = sbr.rel (%p30) target = $region8
    $region5: #{tpu_custom_call.1} parent=1 // loop_body
      %s34 = ssub.s32 %s29, 1
      %s35 = ssub.s32 %s29, 2
      %s42 = sadd.s32 1, %s37
      %p43 = scmp.ge.s32.totalorder %s42, 2
      %s44 = scalar_select %p43, 0, %s42
      %s45 = sadd.s32 1, %s36
      %s46 = scalar_select %p43, %s45, %s36
      %p47 = scmp.ge.s32.totalorder %s46, 2
      %s48 = scalar_select %p47, 0, %s46
      %s49 = ssub.s32 %s36, %s48
      %p50 = scmp.eq.s32.totalorder %s49, 0
      %s52 = sadd.s32 %s51, 1
      %s53 = scalar_select %p50, %s51, %s52
      %p56 = pneg %p50
      %p57 = scmp.eq.s32.totalorder %s29, 3
      %p58 = por %p56, %p57
      %p59 = scmp.ne.s32.totalorder %s51, %s54
      %p60 = scmp.eq.s32.totalorder %s29, 0
      %p61 = por %p59, %p60
      %p62 = scmp.ne.s32.totalorder %s51, %s54
      %p63 = scmp.eq.s32.totalorder %s34, 3
      %p64 = por %p62, %p63
      %p65 = scmp.ne.s32.totalorder %s54, %s55
      %p66 = scmp.eq.s32.totalorder %s34, 0
      %p67 = por %p65, %p66
      %p68 = scmp.ne.s32.totalorder %s54, %s55
      %p69 = scmp.eq.s32.totalorder %s35, 3
      %p70 = por %p68, %p69
      %p72 = scmp.ne.s32.totalorder %s55, %s71
      %p73 = scmp.eq.s32.totalorder %s35, 0
      %p74 = por %p72, %p73
      %s75 = ssub.s32 %s36, %s48
      %p76 = scmp.eq.s32.totalorder %s75, 0
      %s78 = sadd.s32 %s77, 1
      %s79 = scalar_select %p76, %s77, %s78
      %p82 = pneg %p76
      %p83 = scmp.eq.s32.totalorder %s29, 3
      %p84 = por %p82, %p83
      %p85 = scmp.ne.s32.totalorder %s77, %s80
      %p86 = scmp.eq.s32.totalorder %s29, 0
      %p87 = por %p85, %p86
      %p88 = scmp.ne.s32.totalorder %s77, %s80
      %p89 = scmp.eq.s32.totalorder %s34, 3
      %p90 = por %p88, %p89
      %p91 = scmp.ne.s32.totalorder %s80, %s81
      %p92 = scmp.eq.s32.totalorder %s34, 0
      %p93 = por %p91, %p92
      %p94 = scmp.ne.s32.totalorder %s80, %s81
      %p95 = scmp.eq.s32.totalorder %s35, 3
      %p96 = por %p94, %p95
      %p98 = scmp.ne.s32.totalorder %s81, %s97
      %p99 = scmp.eq.s32.totalorder %s35, 0
      %p100 = por %p98, %p99
      %s101 = ssub.s32 %s37, %s44
      %p102 = scmp.eq.s32.totalorder %s101, 0
      %s104 = sadd.s32 %s103, 1
      %s105 = scalar_select %p102, %s103, %s104
      %p108 = pneg %p102
      %p109 = scmp.eq.s32.totalorder %s29, 3
      %p110 = por %p108, %p109
      %p111 = scmp.ne.s32.totalorder %s103, %s106
      %p112 = scmp.eq.s32.totalorder %s29, 0
      %p113 = por %p111, %p112
      %p114 = scmp.ne.s32.totalorder %s103, %s106
      %p115 = scmp.eq.s32.totalorder %s34, 3
      %p116 = por %p114, %p115
      %p117 = scmp.ne.s32.totalorder %s106, %s107
      %p118 = scmp.eq.s32.totalorder %s34, 0
      %p119 = por %p117, %p118
      %p120 = scmp.ne.s32.totalorder %s106, %s107
      %p121 = scmp.eq.s32.totalorder %s35, 3
      %p122 = por %p120, %p121
      %p124 = scmp.ne.s32.totalorder %s107, %s123
      %p125 = scmp.eq.s32.totalorder %s35, 0
      %p126 = por %p124, %p125
      %s127 = ssub.s32 %s37, %s44
      %p128 = scmp.eq.s32.totalorder %s127, 0
      %s130 = sadd.s32 %s129, 1
      %s131 = scalar_select %p128, %s129, %s130
      %p134 = pneg %p128
      %p135 = scmp.eq.s32.totalorder %s29, 3
      %p136 = por %p134, %p135
      %p137 = scmp.ne.s32.totalorder %s129, %s132
      %p138 = scmp.eq.s32.totalorder %s29, 0
      %p139 = por %p137, %p138
      %p140 = scmp.ne.s32.totalorder %s129, %s132
      %p141 = scmp.eq.s32.totalorder %s34, 3
      %p142 = por %p140, %p141
      %p143 = scmp.ne.s32.totalorder %s132, %s133
      %p144 = scmp.eq.s32.totalorder %s34, 0
      %p145 = por %p143, %p144
      %p146 = scmp.ne.s32.totalorder %s132, %s133
      %p147 = scmp.eq.s32.totalorder %s35, 3
      %p148 = por %p146, %p147
      %p150 = scmp.ne.s32.totalorder %s133, %s149
      %p151 = scmp.eq.s32.totalorder %s35, 0
      %p152 = por %p150, %p151
      %s153 = ssub.s32 %s37, %s44
      %p154 = scmp.eq.s32.totalorder %s153, 0
      %s156 = sadd.s32 %s155, 1
      %s157 = scalar_select %p154, %s155, %s156
      %p160 = pneg %p154
      %p161 = scmp.eq.s32.totalorder %s29, 3
      %p162 = por %p160, %p161
      %p163 = scmp.ne.s32.totalorder %s155, %s158
      %p164 = scmp.eq.s32.totalorder %s29, 0
      %p165 = por %p163, %p164
      %p166 = scmp.ne.s32.totalorder %s155, %s158
      %p167 = scmp.eq.s32.totalorder %s34, 3
      %p168 = por %p166, %p167
      %p169 = scmp.ne.s32.totalorder %s158, %s159
      %p170 = scmp.eq.s32.totalorder %s34, 0
      %p171 = por %p169, %p170
      %p172 = scmp.ne.s32.totalorder %s158, %s159
      %p173 = scmp.eq.s32.totalorder %s35, 3
      %p174 = por %p172, %p173
      %p176 = scmp.ne.s32.totalorder %s159, %s175
      %p177 = scmp.eq.s32.totalorder %s35, 0
      %p178 = por %p176, %p177
      %s179 = ssub.s32 %s37, %s44
      %p180 = scmp.eq.s32.totalorder %s179, 0
      %s182 = sadd.s32 %s181, 1
      %s183 = scalar_select %p180, %s181, %s182
      %p186 = pneg %p180
      %p187 = scmp.eq.s32.totalorder %s29, 3
      %p188 = por %p186, %p187
      %p189 = scmp.ne.s32.totalorder %s181, %s184
      %p190 = scmp.eq.s32.totalorder %s29, 0
      %p191 = por %p189, %p190
      %p192 = scmp.ne.s32.totalorder %s181, %s184
      %p193 = scmp.eq.s32.totalorder %s34, 3
      %p194 = por %p192, %p193
      %p195 = scmp.ne.s32.totalorder %s184, %s185
      %p196 = scmp.eq.s32.totalorder %s34, 0
      %p197 = por %p195, %p196
      %p198 = scmp.ne.s32.totalorder %s184, %s185
      %p199 = scmp.eq.s32.totalorder %s35, 3
      %p200 = por %p198, %p199
      %p202 = scmp.ne.s32.totalorder %s185, %s201
      %p203 = scmp.eq.s32.totalorder %s35, 0
      %p204 = por %p202, %p203
      %s205 = ssub.s32 %s37, %s44
      %p206 = scmp.eq.s32.totalorder %s205, 0
      %s208 = sadd.s32 %s207, 1
      %s209 = scalar_select %p206, %s207, %s208
      %p212 = pneg %p206
      %p213 = scmp.eq.s32.totalorder %s29, 3
      %p214 = por %p212, %p213
      %p215 = scmp.ne.s32.totalorder %s207, %s210
      %p216 = scmp.eq.s32.totalorder %s29, 0
      %p217 = por %p215, %p216
      %p218 = scmp.ne.s32.totalorder %s207, %s210
      %p219 = scmp.eq.s32.totalorder %s34, 3
      %p220 = por %p218, %p219
      %p221 = scmp.ne.s32.totalorder %s210, %s211
      %p222 = scmp.eq.s32.totalorder %s34, 0
      %p223 = por %p221, %p222
      %p224 = scmp.ne.s32.totalorder %s210, %s211
      %p225 = scmp.eq.s32.totalorder %s35, 3
      %p226 = por %p224, %p225
      %p228 = scmp.ne.s32.totalorder %s211, %s227
      %p229 = scmp.eq.s32.totalorder %s35, 0
      %p230 = por %p228, %p229
      %s231 = ssub.s32 %s37, %s44
      %p232 = scmp.eq.s32.totalorder %s231, 0
      %s234 = sadd.s32 %s233, 1
      %s235 = scalar_select %p232, %s233, %s234
      %p238 = pneg %p232
      %p239 = scmp.eq.s32.totalorder %s29, 3
      %p240 = por %p238, %p239
      %p241 = scmp.ne.s32.totalorder %s233, %s236
      %p242 = scmp.eq.s32.totalorder %s29, 0
      %p243 = por %p241, %p242
      %p244 = scmp.ne.s32.totalorder %s233, %s236
      %p245 = scmp.eq.s32.totalorder %s34, 3
      %p246 = por %p244, %p245
      %p247 = scmp.ne.s32.totalorder %s236, %s237
      %p248 = scmp.eq.s32.totalorder %s34, 0
      %p249 = por %p247, %p248
      %p250 = scmp.ne.s32.totalorder %s236, %s237
      %p251 = scmp.eq.s32.totalorder %s35, 3
      %p252 = por %p250, %p251
      %p254 = scmp.ne.s32.totalorder %s237, %s253
      %p255 = scmp.eq.s32.totalorder %s35, 0
      %p256 = por %p254, %p255
      %s257 = ssub.s32 %s37, %s44
      %p258 = scmp.eq.s32.totalorder %s257, 0
      %s260 = sadd.s32 %s259, 1
      %s261 = scalar_select %p258, %s259, %s260
      %p264 = pneg %p258
      %p265 = scmp.eq.s32.totalorder %s29, 3
      %p266 = por %p264, %p265
      %p267 = scmp.ne.s32.totalorder %s259, %s262
      %p268 = scmp.eq.s32.totalorder %s29, 0
      %p269 = por %p267, %p268
      %p270 = scmp.ne.s32.totalorder %s259, %s262
      %p271 = scmp.eq.s32.totalorder %s34, 3
      %p272 = por %p270, %p271
      %p273 = scmp.ne.s32.totalorder %s262, %s263
      %p274 = scmp.eq.s32.totalorder %s34, 0
      %p275 = por %p273, %p274
      %p276 = scmp.ne.s32.totalorder %s262, %s263
      %p277 = scmp.eq.s32.totalorder %s35, 3
      %p278 = por %p276, %p277
      %p280 = scmp.ne.s32.totalorder %s263, %s279
      %p281 = scmp.eq.s32.totalorder %s35, 0
      %p282 = por %p280, %p281
      %s283 = ssub.s32 %s37, %s44
      %p284 = scmp.eq.s32.totalorder %s283, 0
      %s286 = sadd.s32 %s285, 1
      %s287 = scalar_select %p284, %s285, %s286
      %p290 = pneg %p284
      %p291 = scmp.eq.s32.totalorder %s29, 3
      %p292 = por %p290, %p291
      %p293 = scmp.ne.s32.totalorder %s285, %s288
      %p294 = scmp.eq.s32.totalorder %s29, 0
      %p295 = por %p293, %p294
      %p296 = scmp.ne.s32.totalorder %s285, %s288
      %p297 = scmp.eq.s32.totalorder %s34, 3
      %p298 = por %p296, %p297
      %p299 = scmp.ne.s32.totalorder %s288, %s289
      %p300 = scmp.eq.s32.totalorder %s34, 0
      %p301 = por %p299, %p300
      %p302 = scmp.ne.s32.totalorder %s288, %s289
      %p303 = scmp.eq.s32.totalorder %s35, 3
      %p304 = por %p302, %p303
      %p306 = scmp.ne.s32.totalorder %s289, %s305
      %p307 = scmp.eq.s32.totalorder %s35, 0
      %p308 = por %p306, %p307
      %s309 = ssub.s32 %s37, %s44
      %p310 = scmp.eq.s32.totalorder %s309, 0
      %s312 = sadd.s32 %s311, 1
      %s313 = scalar_select %p310, %s311, %s312
      %p316 = pneg %p310
      %p317 = scmp.eq.s32.totalorder %s29, 3
      %p318 = por %p316, %p317
      %p319 = scmp.ne.s32.totalorder %s311, %s314
      %p320 = scmp.eq.s32.totalorder %s29, 0
      %p321 = por %p319, %p320
      %p322 = scmp.ne.s32.totalorder %s311, %s314
      %p323 = scmp.eq.s32.totalorder %s34, 3
      %p324 = por %p322, %p323
      %p325 = scmp.ne.s32.totalorder %s314, %s315
      %p326 = scmp.eq.s32.totalorder %s34, 0
      %p327 = por %p325, %p326
      %p328 = scmp.ne.s32.totalorder %s314, %s315
      %p329 = scmp.eq.s32.totalorder %s35, 3
      %p330 = por %p328, %p329
      %p332 = scmp.ne.s32.totalorder %s315, %s331
      %p333 = scmp.eq.s32.totalorder %s35, 0
      %p334 = por %p332, %p333
      %s335 = ssub.s32 %s37, %s44
      %p336 = scmp.eq.s32.totalorder %s335, 0
      %s338 = sadd.s32 %s337, 1
      %s339 = scalar_select %p336, %s337, %s338
      %p342 = pneg %p336
      %p343 = scmp.eq.s32.totalorder %s29, 3
      %p344 = por %p342, %p343
      %p345 = scmp.ne.s32.totalorder %s337, %s340
      %p346 = scmp.eq.s32.totalorder %s29, 0
      %p347 = por %p345, %p346
      %p348 = scmp.ne.s32.totalorder %s337, %s340
      %p349 = scmp.eq.s32.totalorder %s34, 3
      %p350 = por %p348, %p349
      %p351 = scmp.ne.s32.totalorder %s340, %s341
      %p352 = scmp.eq.s32.totalorder %s34, 0
      %p353 = por %p351, %p352
      %p354 = scmp.ne.s32.totalorder %s340, %s341
      %p355 = scmp.eq.s32.totalorder %s35, 3
      %p356 = por %p354, %p355
      %p358 = scmp.ne.s32.totalorder %s341, %s357
      %p359 = scmp.eq.s32.totalorder %s35, 0
      %p360 = por %p358, %p359
      %s361 = ssub.s32 %s37, %s44
      %p362 = scmp.eq.s32.totalorder %s361, 0
      %s364 = sadd.s32 %s363, 1
      %s365 = scalar_select %p362, %s363, %s364
      %p368 = pneg %p362
      %p369 = scmp.eq.s32.totalorder %s29, 3
      %p370 = por %p368, %p369
      %p371 = scmp.ne.s32.totalorder %s363, %s366
      %p372 = scmp.eq.s32.totalorder %s29, 0
      %p373 = por %p371, %p372
      %p374 = scmp.ne.s32.totalorder %s363, %s366
      %p375 = scmp.eq.s32.totalorder %s34, 3
      %p376 = por %p374, %p375
      %p377 = scmp.ne.s32.totalorder %s366, %s367
      %p378 = scmp.eq.s32.totalorder %s34, 0
      %p379 = por %p377, %p378
      %p380 = scmp.ne.s32.totalorder %s366, %s367
      %p381 = scmp.eq.s32.totalorder %s35, 3
      %p382 = por %p380, %p381
      %p384 = scmp.ne.s32.totalorder %s367, %s383
      %p385 = scmp.eq.s32.totalorder %s35, 0
      %p386 = por %p384, %p385
      %s387 = ssub.s32 %s37, %s44
      %p388 = scmp.eq.s32.totalorder %s387, 0
      %s390 = sadd.s32 %s389, 1
      %s391 = scalar_select %p388, %s389, %s390
      %p394 = pneg %p388
      %p395 = scmp.eq.s32.totalorder %s29, 3
      %p396 = por %p394, %p395
      %p397 = scmp.ne.s32.totalorder %s389, %s392
      %p398 = scmp.eq.s32.totalorder %s29, 0
      %p399 = por %p397, %p398
      %p400 = scmp.ne.s32.totalorder %s389, %s392
      %p401 = scmp.eq.s32.totalorder %s34, 3
      %p402 = por %p400, %p401
      %p403 = scmp.ne.s32.totalorder %s392, %s393
      %p404 = scmp.eq.s32.totalorder %s34, 0
      %p405 = por %p403, %p404
      %p406 = scmp.ne.s32.totalorder %s392, %s393
      %p407 = scmp.eq.s32.totalorder %s35, 3
      %p408 = por %p406, %p407
      %p410 = scmp.ne.s32.totalorder %s393, %s409
      %p411 = scmp.eq.s32.totalorder %s35, 0
      %p412 = por %p410, %p411
      %s413 = ssub.s32 %s36, %s48
      %p414 = scmp.eq.s32.totalorder %s413, 0
      %s416 = sadd.s32 %s415, 1
      %s417 = scalar_select %p414, %s415, %s416
      %p420 = pneg %p414
      %p421 = scmp.eq.s32.totalorder %s29, 3
      %p422 = por %p420, %p421
      %p423 = scmp.ne.s32.totalorder %s415, %s418
      %p424 = scmp.eq.s32.totalorder %s29, 0
      %p425 = por %p423, %p424
      %p426 = scmp.ne.s32.totalorder %s415, %s418
      %p427 = scmp.eq.s32.totalorder %s34, 3
      %p428 = por %p426, %p427
      %p429 = scmp.ne.s32.totalorder %s418, %s419
      %p430 = scmp.eq.s32.totalorder %s34, 0
      %p431 = por %p429, %p430
      %p432 = scmp.ne.s32.totalorder %s418, %s419
      %p433 = scmp.eq.s32.totalorder %s35, 3
      %p434 = por %p432, %p433
      %p436 = scmp.ne.s32.totalorder %s419, %s435
      %p437 = scmp.eq.s32.totalorder %s35, 0
      %p438 = por %p436, %p437
      %p439 = scmp.le.s32.totalorder 1, %s29
      %p440 = scmp.lt.s32.totalorder %s29, 5
      %p441 = pnand %p439, %p440
      %p442 = pneg %p441
      // Predicated region
      $region9: #{tpu_custom_call.1} parent=5 // pred_check
        _
      $region10: #{tpu_custom_call.1} parent=5 // pred_check_branch
        %444 = sbr.rel (%p441) target = $region12
      $region11: #{tpu_custom_call.1} parent=5 // pred_region
        %s445 = ssub.s32 %s29, 1
      $region12: #{tpu_custom_call.1} parent=5 // pred_fallthru
        _
      %p446 = scmp.lt.s32.totalorder %s29, 4
      // Predicated region
      $region13: #{tpu_custom_call.1} parent=5 // pred_check
        %p447 = pneg %p446
      $region14: #{tpu_custom_call.1} parent=5 // pred_check_branch
        %449 = sbr.rel (%p447) target = $region16
      $region15: #{tpu_custom_call.1} parent=5 // pred_region
        // Predicated region
        $region17: #{tpu_custom_call.1} parent=15 // pred_check
          %p450 = pneg %p61
        $region18: #{tpu_custom_call.1} parent=15 // pred_check_branch
          %452 = sbr.rel (%p450) target = $region20
        $region19: #{tpu_custom_call.1} parent=15 // pred_region
          %s453 = smul.u32 2, %s36
          %p454 = scmp.lt.s32.totalorder %s453, 3
          %s455 = scalar_select %p454, %s453, 3
          %s456 = smul.addr %s455, 8
          %s457 = scalar_lea.vmem %s0, %s456
          %s458 = smul.u32 2, %s36
        $region20: #{tpu_custom_call.1} parent=15 // pred_fallthru
          _
        // Predicated region
        $region21: #{tpu_custom_call.1} parent=15 // pred_check
          %p459 = pneg %p87
        $region22: #{tpu_custom_call.1} parent=15 // pred_check_branch
          %461 = sbr.rel (%p459) target = $region24
        $region23: #{tpu_custom_call.1} parent=15 // pred_region
          %s462 = smul.u32 2, %s36
          %p463 = scmp.lt.s32.totalorder %s462, 3
          %s464 = scalar_select %p463, %s462, 3
          %s465 = smul.addr %s464, 8
          %s466 = scalar_lea.vmem %s1, %s465
          %s467 = smul.u32 2, %s36
        $region24: #{tpu_custom_call.1} parent=15 // pred_fallthru
          _
        // Predicated region
        $region25: #{tpu_custom_call.1} parent=15 // pred_check
          %p468 = pneg %p113
        $region26: #{tpu_custom_call.1} parent=15 // pred_check_branch
          %470 = sbr.rel (%p468) target = $region28
        $region27: #{tpu_custom_call.1} parent=15 // pred_region
          %p471 = scmp.lt.s32.totalorder %s37, 1
          %s472 = scalar_select %p471, %s37, 1
          %s473 = smul.addr %s472, 4
          %s474 = smul.addr %s473, 4
          %s475 = scalar_lea.vmem %s2, %s474
        $region28: #{tpu_custom_call.1} parent=15 // pred_fallthru
          _
        // Predicated region
        $region29: #{tpu_custom_call.1} parent=15 // pred_check
          %p476 = pneg %p139
        $region30: #{tpu_custom_call.1} parent=15 // pred_check_branch
          %478 = sbr.rel (%p476) target = $region32
        $region31: #{tpu_custom_call.1} parent=15 // pred_region
          %s479 = sand.u32 %s129, 1
          %s480 = scalar_lea.sflag [#allocation4], %s479
          %s481 = sand.u32 %s129, 1
          %s482 = scalar_lea.vmem [#allocation3], %s481
          %484 = vsyncadd %s480, 0
          %s485 = scalar_lea.hbm %s3, %s37
          %s487 = sshll.u32 %s485, 4
          %s488 = int_to_ptr.hbm [resolvable:$true] %s487
          %s489 = sshll.u32 %s482, 4
          %s490 = int_to_ptr.vmem [resolvable:$true] %s489
          %492 = dma.hbm_to_vmem [thread:$0]  %s488, 16, %s490, %s480
        $region32: #{tpu_custom_call.1} parent=15 // pred_fallthru
          _
        // Predicated region
        $region33: #{tpu_custom_call.1} parent=15 // pred_check
          %p493 = pneg %p165
        $region34: #{tpu_custom_call.1} parent=15 // pred_check_branch
          %495 = sbr.rel (%p493) target = $region36
        $region35: #{tpu_custom_call.1} parent=15 // pred_region
          %p496 = scmp.lt.s32.totalorder %s37, 1
          %s497 = scalar_select %p496, %s37, 1
          %s498 = smul.addr %s497, 4
          %s499 = smul.addr %s498, 4
          %s500 = scalar_lea.vmem %s4, %s499
        $region36: #{tpu_custom_call.1} parent=15 // pred_fallthru
          _
        // Predicated region
        $region37: #{tpu_custom_call.1} parent=15 // pred_check
          %p501 = pneg %p191
        $region38: #{tpu_custom_call.1} parent=15 // pred_check_branch
          %503 = sbr.rel (%p501) target = $region40
        $region39: #{tpu_custom_call.1} parent=15 // pred_region
          %p504 = scmp.lt.s32.totalorder %s37, 1
          %s505 = scalar_select %p504, %s37, 1
          %s506 = scalar_lea.vmem %s5, %s505
        $region40: #{tpu_custom_call.1} parent=15 // pred_fallthru
          _
        // Predicated region
        $region41: #{tpu_custom_call.1} parent=15 // pred_check
          %p507 = pneg %p217
        $region42: #{tpu_custom_call.1} parent=15 // pred_check_branch
          %509 = sbr.rel (%p507) target = $region44
        $region43: #{tpu_custom_call.1} parent=15 // pred_region
          %p510 = scmp.lt.s32.totalorder %s37, 1
          %s511 = scalar_select %p510, %s37, 1
          %s512 = scalar_lea.vmem %s6, %s511
        $region44: #{tpu_custom_call.1} parent=15 // pred_fallthru
          _
        // Predicated region
        $region45: #{tpu_custom_call.1} parent=15 // pred_check
          %p513 = pneg %p243
        $region46: #{tpu_custom_call.1} parent=15 // pred_check_branch
          %515 = sbr.rel (%p513) target = $region48
        $region47: #{tpu_custom_call.1} parent=15 // pred_region
          %s516 = sand.u32 %s29, 1
          %s517 = scalar_lea.sflag [#allocation7], %s516
          %s518 = sand.u32 %s233, 1
          %s519 = scalar_lea.vmem [#allocation6], %s518
          %521 = vsyncadd %s517, 0
          %s522 = scalar_lea.hbm %s7, %s37
          %s524 = sshll.u32 %s522, 4
          %s525 = int_to_ptr.hbm [resolvable:$true] %s524
          %s526 = sshll.u32 %s519, 4
          %s527 = int_to_ptr.vmem [resolvable:$true] %s526
          %529 = dma.hbm_to_vmem [thread:$0]  %s525, 16, %s527, %s517
        $region48: #{tpu_custom_call.1} parent=15 // pred_fallthru
          _
        // Predicated region
        $region49: #{tpu_custom_call.1} parent=15 // pred_check
          %p530 = pneg %p269
        $region50: #{tpu_custom_call.1} parent=15 // pred_check_branch
          %532 = sbr.rel (%p530) target = $region52
        $region51: #{tpu_custom_call.1} parent=15 // pred_region
          %p533 = scmp.lt.s32.totalorder %s37, 1
          %s534 = scalar_select %p533, %s37, 1
          %s535 = smul.addr %s534, 4
          %s536 = smul.addr %s535, 4
          %s537 = scalar_lea.vmem %s8, %s536
        $region52: #{tpu_custom_call.1} parent=15 // pred_fallthru
          _
        // Predicated region
        $region53: #{tpu_custom_call.1} parent=15 // pred_check
          %p538 = pneg %p295
        $region54: #{tpu_custom_call.1} parent=15 // pred_check_branch
          %540 = sbr.rel (%p538) target = $region56
        $region55: #{tpu_custom_call.1} parent=15 // pred_region
          %p541 = scmp.lt.s32.totalorder %s37, 1
          %s542 = scalar_select %p541, %s37, 1
          %s543 = scalar_lea.vmem %s9, %s542
        $region56: #{tpu_custom_call.1} parent=15 // pred_fallthru
          _
        // Predicated region
        $region57: #{tpu_custom_call.1} parent=15 // pred_check
          %p544 = pneg %p321
        $region58: #{tpu_custom_call.1} parent=15 // pred_check_branch
          %546 = sbr.rel (%p544) target = $region60
        $region59: #{tpu_custom_call.1} parent=15 // pred_region
          %p547 = scmp.lt.s32.totalorder %s37, 1
          %s548 = scalar_select %p547, %s37, 1
          %s549 = smul.addr %s548, 16
          %s550 = smul.addr %s549, 4
          %s551 = scalar_lea.vmem %s10, %s550
        $region60: #{tpu_custom_call.1} parent=15 // pred_fallthru
          _
        // Predicated region
        $region61: #{tpu_custom_call.1} parent=15 // pred_check
          %p552 = pneg %p347
        $region62: #{tpu_custom_call.1} parent=15 // pred_check_branch
          %554 = sbr.rel (%p552) target = $region64
        $region63: #{tpu_custom_call.1} parent=15 // pred_region
          %p555 = scmp.lt.s32.totalorder %s37, 1
          %s556 = scalar_select %p555, %s37, 1
          %s557 = scalar_lea.vmem %s11, %s556
        $region64: #{tpu_custom_call.1} parent=15 // pred_fallthru
          _
        // Predicated region
        $region65: #{tpu_custom_call.1} parent=15 // pred_check
          %p558 = pneg %p373
        $region66: #{tpu_custom_call.1} parent=15 // pred_check_branch
          %560 = sbr.rel (%p558) target = $region68
        $region67: #{tpu_custom_call.1} parent=15 // pred_region
          %p561 = scmp.lt.s32.totalorder %s37, 1
          %s562 = scalar_select %p561, %s37, 1
          %s563 = scalar_lea.vmem %s12, %s562
        $region68: #{tpu_custom_call.1} parent=15 // pred_fallthru
          _
        // Predicated region
        $region69: #{tpu_custom_call.1} parent=15 // pred_check
          %p564 = pneg %p399
        $region70: #{tpu_custom_call.1} parent=15 // pred_check_branch
          %566 = sbr.rel (%p564) target = $region72
        $region71: #{tpu_custom_call.1} parent=15 // pred_region
          %s567 = sand.u32 %s29, 1
          %s568 = scalar_lea.sflag [#allocation7], %s567
          %s569 = sand.u32 %s389, 1
          %s570 = scalar_lea.vmem [#allocation8], %s569
          %572 = vsyncadd %s568, 0
          %s573 = scalar_lea.hbm %s13, %s37
          %s575 = sshll.u32 %s573, 4
          %s576 = int_to_ptr.hbm [resolvable:$true] %s575
          %s577 = sshll.u32 %s570, 4
          %s578 = int_to_ptr.vmem [resolvable:$true] %s577
          %580 = dma.hbm_to_vmem [thread:$0]  %s576, 16, %s578, %s568
        $region72: #{tpu_custom_call.1} parent=15 // pred_fallthru
          _
      $region16: #{tpu_custom_call.1} parent=5 // pred_fallthru
        _
      %p581 = scmp.le.s32.totalorder 1, %s29
      %p582 = scmp.lt.s32.totalorder %s29, 5
      %p583 = pnand %p581, %p582
      %p584 = pneg %p583
      // Predicated region
      $region73: #{tpu_custom_call.1} parent=5 // pred_check
        _
      $region74: #{tpu_custom_call.1} parent=5 // pred_check_branch
        %586 = sbr.rel (%p583) target = $region76
      $region75: #{tpu_custom_call.1} parent=5 // pred_region
        %s587 = ssub.s32 %s29, 1
        %s588 = sand.u32 %s132, 1
        %s589 = scalar_lea.sflag [#allocation4], %s588
        %s590 = sand.u32 %s132, 1
        %s591 = scalar_lea.vmem [#allocation3], %s590
        // Predicated region
        $region77: #{tpu_custom_call.1} parent=75 // pred_check
          %p592 = pneg %p145
        $region78: #{tpu_custom_call.1} parent=75 // pred_check_branch
          %594 = sbr.rel (%p592) target = $region80
        $region79: #{tpu_custom_call.1} parent=75 // pred_region
          %596 = dma.done %s589, 16
        $region80: #{tpu_custom_call.1} parent=75 // pred_fallthru
          _
        %s597 = sand.u32 %s34, 1
        %s598 = scalar_lea.sflag [#allocation7], %s597
        %s599 = sand.u32 %s236, 1
        %s600 = scalar_lea.vmem [#allocation6], %s599
        // Predicated region
        $region81: #{tpu_custom_call.1} parent=75 // pred_check
          %p601 = pneg %p249
        $region82: #{tpu_custom_call.1} parent=75 // pred_check_branch
          %603 = sbr.rel (%p601) target = $region84
        $region83: #{tpu_custom_call.1} parent=75 // pred_region
          %605 = dma.done %s598, 16
        $region84: #{tpu_custom_call.1} parent=75 // pred_fallthru
          _
        %s606 = sand.u32 %s34, 1
        %s607 = scalar_lea.sflag [#allocation7], %s606
        %s608 = sand.u32 %s392, 1
        %s609 = scalar_lea.vmem [#allocation8], %s608
        // Predicated region
        $region85: #{tpu_custom_call.1} parent=75 // pred_check
          %p610 = pneg %p405
        $region86: #{tpu_custom_call.1} parent=75 // pred_check_branch
          %612 = sbr.rel (%p610) target = $region88
        $region87: #{tpu_custom_call.1} parent=75 // pred_region
          %614 = dma.done %s607, 16
        $region88: #{tpu_custom_call.1} parent=75 // pred_fallthru
          _
        %s615 = smul.u32 2, %s38
        %p616 = scmp.lt.s32.totalorder %s615, 3
        %s617 = scalar_select %p616, %s615, 3
        %s618 = smul.addr %s617, 8
        %s619 = scalar_lea.vmem %s0, %s618
        %p620 = pneg %p67
        %p621 = pneg %p64
        %s622 = smul.u32 2, %s38
        %p623 = scmp.lt.s32.totalorder %s622, 3
        %s624 = scalar_select %p623, %s622, 3
        %s625 = smul.addr %s624, 8
        %s626 = scalar_lea.vmem %s1, %s625
        %p627 = pneg %p93
        %p628 = pneg %p90
        %p629 = scmp.lt.s32.totalorder %s39, 1
        %s630 = scalar_select %p629, %s39, 1
        %s631 = smul.addr %s630, 4
        %s632 = smul.addr %s631, 4
        %s633 = scalar_lea.vmem %s2, %s632
        %p634 = pneg %p119
        %p635 = pneg %p116
        %s636 = sand.u32 %s132, 1
        %s637 = scalar_lea.sflag [#allocation4], %s636
        %s638 = sand.u32 %s132, 1
        %s639 = scalar_lea.vmem [#allocation3], %s638
        %p640 = pneg %p145
        %p641 = pneg %p142
        %p642 = scmp.lt.s32.totalorder %s39, 1
        %s643 = scalar_select %p642, %s39, 1
        %s644 = smul.addr %s643, 4
        %s645 = smul.addr %s644, 4
        %s646 = scalar_lea.vmem %s4, %s645
        %p647 = pneg %p171
        %p648 = pneg %p168
        %p649 = scmp.lt.s32.totalorder %s39, 1
        %s650 = scalar_select %p649, %s39, 1
        %s651 = scalar_lea.vmem %s5, %s650
        %p652 = pneg %p197
        %p653 = pneg %p194
        %p654 = scmp.lt.s32.totalorder %s39, 1
        %s655 = scalar_select %p654, %s39, 1
        %s656 = scalar_lea.vmem %s6, %s655
        %p657 = pneg %p223
        %p658 = pneg %p220
        %s659 = sand.u32 %s34, 1
        %s660 = scalar_lea.sflag [#allocation7], %s659
        %s661 = sand.u32 %s236, 1
        %s662 = scalar_lea.vmem [#allocation6], %s661
        %p663 = pneg %p249
        %p664 = pneg %p246
        %p665 = scmp.lt.s32.totalorder %s39, 1
        %s666 = scalar_select %p665, %s39, 1
        %s667 = smul.addr %s666, 4
        %s668 = smul.addr %s667, 4
        %s669 = scalar_lea.vmem %s8, %s668
        %p670 = pneg %p275
        %p671 = pneg %p272
        %p672 = scmp.lt.s32.totalorder %s39, 1
        %s673 = scalar_select %p672, %s39, 1
        %s674 = scalar_lea.vmem %s9, %s673
        %p675 = pneg %p301
        %p676 = pneg %p298
        %p677 = scmp.lt.s32.totalorder %s39, 1
        %s678 = scalar_select %p677, %s39, 1
        %s679 = smul.addr %s678, 16
        %s680 = smul.addr %s679, 4
        %s681 = scalar_lea.vmem %s10, %s680
        %p682 = pneg %p327
        %p683 = pneg %p324
        %p684 = scmp.lt.s32.totalorder %s39, 1
        %s685 = scalar_select %p684, %s39, 1
        %s686 = scalar_lea.vmem %s11, %s685
        %p687 = pneg %p353
        %p688 = pneg %p350
        %p689 = scmp.lt.s32.totalorder %s39, 1
        %s690 = scalar_select %p689, %s39, 1
        %s691 = scalar_lea.vmem %s12, %s690
        %p692 = pneg %p379
        %p693 = pneg %p376
        %s694 = sand.u32 %s34, 1
        %s695 = scalar_lea.sflag [#allocation7], %s694
        %s696 = sand.u32 %s392, 1
        %s697 = scalar_lea.vmem [#allocation8], %s696
        %p698 = pneg %p405
        %p699 = pneg %p402
        %p700 = pneg %p431
        %p701 = pneg %p428
        %s702 = sand.u32 %s418, 1
        %s703 = scalar_lea.sflag [#allocation5], %s702
        %s704 = sand.u32 %s418, 1
        %s705 = smul.addr %s704, 16
        %s706 = scalar_lea.vmem [#allocation9], %s705
        %s707 = smul.u32 2, %s38
        %p708 = scmp.lt.s32.totalorder %s707, 3
        %s709 = scalar_select %p708, %s707, 3
        %s710 = smul.addr %s709, 8
        %s711 = scalar_lea.vmem %s0, %s710
        %s712 = smul.u32 2, %s38
        %s713 = smul.u32 2, %s38
        %p714 = scmp.lt.s32.totalorder %s713, 3
        %s715 = scalar_select %p714, %s713, 3
        %s716 = smul.addr %s715, 8
        %s717 = scalar_lea.vmem %s1, %s716
        %s718 = smul.u32 2, %s38
        %p719 = scmp.lt.s32.totalorder %s39, 1
        %s720 = scalar_select %p719, %s39, 1
        %s721 = smul.addr %s720, 4
        %s722 = smul.addr %s721, 4
        %s723 = scalar_lea.vmem %s2, %s722
        %p724 = scmp.lt.s32.totalorder %s39, 1
        %s725 = scalar_select %p724, %s39, 1
        %s726 = smul.addr %s725, 4
        %s727 = smul.addr %s726, 4
        %s728 = scalar_lea.vmem %s4, %s727
        %p729 = scmp.lt.s32.totalorder %s39, 1
        %s730 = scalar_select %p729, %s39, 1
        %s731 = scalar_lea.vmem %s5, %s730
        %p732 = scmp.lt.s32.totalorder %s39, 1
        %s733 = scalar_select %p732, %s39, 1
        %s734 = scalar_lea.vmem %s6, %s733
        %p735 = scmp.lt.s32.totalorder %s39, 1
        %s736 = scalar_select %p735, %s39, 1
        %s737 = smul.addr %s736, 4
        %s738 = smul.addr %s737, 4
        %s739 = scalar_lea.vmem %s8, %s738
        %p740 = scmp.lt.s32.totalorder %s39, 1
        %s741 = scalar_select %p740, %s39, 1
        %s742 = scalar_lea.vmem %s9, %s741
        %p743 = scmp.lt.s32.totalorder %s39, 1
        %s744 = scalar_select %p743, %s39, 1
        %s745 = smul.addr %s744, 16
        %s746 = smul.addr %s745, 4
        %s747 = scalar_lea.vmem %s10, %s746
        %p748 = scmp.lt.s32.totalorder %s39, 1
        %s749 = scalar_select %p748, %s39, 1
        %s750 = scalar_lea.vmem %s11, %s749
        %p751 = scmp.lt.s32.totalorder %s39, 1
        %s752 = scalar_select %p751, %s39, 1
        %s753 = scalar_lea.vmem %s12, %s752
        %s754 = smul.u32 2, %s38
        %p756 = scmp.eq.s32.totalorder %s39, 0
        // Predicated region
        $region89: #{tpu_custom_call.1} parent=75 // pred_check
          %p757 = pneg %p756
        $region90: #{tpu_custom_call.1} parent=75 // pred_check_branch
          %759 = sbr.rel (%p757) target = $region92
        $region91: #{tpu_custom_call.1} parent=75 // pred_region
          %v760 = vld [vmem:[%s711] sm:$0xff]
          %v761 = vld [vmem:[%s711 + $0x8] sm:$0xff]
          %vm762 = vcmask 261120
          %763 = vst.msk [vmem:[#allocation2] sm:$0xff] %vm762, %v760
          %764 = vst.msk [vmem:[#allocation2 + $0x8] sm:$0xff] %vm762, %v761
        $region92: #{tpu_custom_call.1} parent=75 // pred_fallthru
          _
        %v765 = vld [vmem:[#allocation2] sm:$0xff]
        %v766 = vld [vmem:[#allocation2 + $0x8] sm:$0xff]
        %v767 = vpack.c.bf16 %v766, %v765
        %v768 = vld [vmem:[%s723] sm:$0xf]
        %v769 = vld [vmem:[%s723 + $0x4] sm:$0xf]
        %v770 = vld [vmem:[%s723 + $0x8] sm:$0xf]
        %v771 = vld [vmem:[%s723 + $0xc] sm:$0xf]
        %v772 = vld [vmem:[%s591] sm:$0x1]
        %v774 = vperm.slane %v772, 0
        %v780 = vunpack.c.l.b16 %v768
        %v781 = vunpack.c.l.b16 %v769
        %v782 = vunpack.c.l.b16 %v770
        %v783 = vunpack.c.l.b16 %v771
        %v784 = vpack.c.b16 %v781, %v780
        %v785 = vpack.c.b16 %v783, %v782
        %vm788 = vcmask 261120
        %v790 = vsel %vm788, %v767, 0
        %792 = vmatpush.bf16.msra.mxu0 0
        %793 = vmatpush.bf16.msra.mxu0 0
        %794 = vmatpush.bf16.msra.mxu0 0
        %795 = vmatpush.bf16.msra.mxu0 0
        %796 = vmatpush.bf16.msra.mxu0 0
        %797 = vmatpush.bf16.msra.mxu0 0
        %798 = vmatpush.bf16.msra.mxu0 %v785
        %799 = vmatpush.bf16.msra.mxu0 %v784
        %800 = vmatmul.bf16.gmra.mxu0 %v790
        %v801 = vpop.f32.mrf.mxu0
        %v802 = vadd.f32 %v774, %v801
        %v803 = vpop.f32.mrf.mxu0
        %v804 = vadd.f32 %v774, %v803
        %805 = vdwg.mxu0
        %v806 = vpack.c.bf16 %v802, %v802
        %v807 = vpack.c.bf16 %v804, %v804
        %810 = vrot.lane.b32.xlu0 %v806, 120
        %v811 = vpop.permute.xlu0 %810
        %812 = vrot.lane.b32.xlu0 %v807, 120
        %v813 = vpop.permute.xlu0 %812
        %814 = vrot.lane.b32.xlu0 %v806, 112
        %v815 = vpop.permute.xlu0 %814
        %816 = vrot.lane.b32.xlu0 %v807, 112
        %v817 = vpop.permute.xlu0 %816
        %818 = vrot.lane.b32.xlu0 %v806, 104
        %v819 = vpop.permute.xlu0 %818
        %820 = vrot.lane.b32.xlu0 %v807, 104
        %v821 = vpop.permute.xlu0 %820
        %v824 = vpack.i.b16 %v811, %v806
        %v825 = vshrl.u32 %v806, 16
        %v826 = vshrl.u32 %v811, 16
        %v827 = vpack.i.b16 %v826, %v825
        %v830 = vpack.i.b16 %v819, %v815
        %v831 = vshrl.u32 %v815, 16
        %v832 = vshrl.u32 %v819, 16
        %v833 = vpack.i.b16 %v832, %v831
        %v836 = vpack.i.b16 %v813, %v807
        %v837 = vshrl.u32 %v807, 16
        %v838 = vshrl.u32 %v813, 16
        %v839 = vpack.i.b16 %v838, %v837
        %v842 = vpack.i.b16 %v821, %v817
        %v843 = vshrl.u32 %v817, 16
        %v844 = vshrl.u32 %v821, 16
        %v845 = vpack.i.b16 %v844, %v843
        %v848 = vunpack.c.l.s4 1983009808
        %v849 = vunpack.c.0.s8 %v848
        %v850 = vperm.slane %v824, %v849
        %v853 = vunpack.c.l.s4 1983009808
        %v854 = vunpack.c.0.s8 %v853
        %v855 = vperm.slane %v830, %v854
        %v856 = vrot.slane %v855, 4
        %vm857 = vcmask 1047556
        %v858 = vsel %vm857, %v856, %v850
        %v859 = vrot.slane %v850, 4
        %v860 = vsel %vm857, %v855, %v859
        %v862 = vunpack.c.l.s4 1934713408
        %v863 = vunpack.c.0.s8 %v862
        %v864 = vperm.slane %v858, %v863
        %v866 = vunpack.c.l.s4 1934713408
        %v867 = vunpack.c.0.s8 %v866
        %v868 = vperm.slane %v860, %v867
        %v869 = vrot.slane %v864, 4
        %v870 = vsel %vm857, 0, %v869
        %v871 = vrot.slane %v868, 4
        %v872 = vsel %vm857, 0, %v871
        %v875 = vunpack.c.l.s4 1983009808
        %v876 = vunpack.c.0.s8 %v875
        %v877 = vperm.slane %v827, %v876
        %v880 = vunpack.c.l.s4 1983009808
        %v881 = vunpack.c.0.s8 %v880
        %v882 = vperm.slane %v833, %v881
        %v883 = vrot.slane %v882, 4
        %v884 = vsel %vm857, %v883, %v877
        %v885 = vrot.slane %v877, 4
        %v886 = vsel %vm857, %v882, %v885
        %v888 = vunpack.c.l.s4 1934713408
        %v889 = vunpack.c.0.s8 %v888
        %v890 = vperm.slane %v884, %v889
        %v892 = vunpack.c.l.s4 1934713408
        %v893 = vunpack.c.0.s8 %v892
        %v894 = vperm.slane %v886, %v893
        %v895 = vrot.slane %v890, 4
        %v896 = vsel %vm857, 0, %v895
        %v897 = vrot.slane %v894, 4
        %v898 = vsel %vm857, 0, %v897
        %v901 = vunpack.c.l.s4 1983009808
        %v902 = vunpack.c.0.s8 %v901
        %v903 = vperm.slane %v836, %v902
        %v906 = vunpack.c.l.s4 1983009808
        %v907 = vunpack.c.0.s8 %v906
        %v908 = vperm.slane %v842, %v907
        %v909 = vrot.slane %v908, 4
        %v910 = vsel %vm857, %v909, %v903
        %v911 = vrot.slane %v903, 4
        %v912 = vsel %vm857, %v908, %v911
        %v914 = vunpack.c.l.s4 1934713408
        %v915 = vunpack.c.0.s8 %v914
        %v916 = vperm.slane %v910, %v915
        %v918 = vunpack.c.l.s4 1934713408
        %v919 = vunpack.c.0.s8 %v918
        %v920 = vperm.slane %v912, %v919
        %v921 = vrot.slane %v916, 4
        %v922 = vsel %vm857, 0, %v921
        %v923 = vrot.slane %v920, 4
        %v924 = vsel %vm857, 0, %v923
        %v927 = vunpack.c.l.s4 1983009808
        %v928 = vunpack.c.0.s8 %v927
        %v929 = vperm.slane %v839, %v928
        %v932 = vunpack.c.l.s4 1983009808
        %v933 = vunpack.c.0.s8 %v932
        %v934 = vperm.slane %v845, %v933
        %v935 = vrot.slane %v934, 4
        %v936 = vsel %vm857, %v935, %v929
        %v937 = vrot.slane %v929, 4
        %v938 = vsel %vm857, %v934, %v937
        %v940 = vunpack.c.l.s4 1934713408
        %v941 = vunpack.c.0.s8 %v940
        %v942 = vperm.slane %v936, %v941
        %v944 = vunpack.c.l.s4 1934713408
        %v945 = vunpack.c.0.s8 %v944
        %v946 = vperm.slane %v938, %v945
        %v947 = vrot.slane %v942, 4
        %v948 = vsel %vm857, 0, %v947
        %v949 = vrot.slane %v946, 4
        %v950 = vsel %vm857, 0, %v949
        %v951 = vsel %vm857, %v871, %v864
        %v953 = vunpack.c.l.s4 1983009808
        %v954 = vunpack.c.0.s8 %v953
        %v955 = vperm.slane %v951, %v954
        %v956 = vrot.slane %v872, 4
        %v957 = vsel %vm857, %v956, %v870
        %v959 = vunpack.c.l.s4 1983009808
        %v960 = vunpack.c.0.s8 %v959
        %v961 = vperm.slane %v957, %v960
        %v962 = vrot.slane %v961, 4
        %v963 = vsel %vm857, %v962, %v955
        %v965 = vunpack.c.l.s4 1934713408
        %v966 = vunpack.c.0.s8 %v965
        %v967 = vperm.slane %v963, %v966
        %v968 = vrot.slane %v967, 4
        %v969 = vsel %vm857, 0, %v968
        %v970 = vsel %vm857, %v897, %v890
        %v972 = vunpack.c.l.s4 1983009808
        %v973 = vunpack.c.0.s8 %v972
        %v974 = vperm.slane %v970, %v973
        %v975 = vrot.slane %v898, 4
        %v976 = vsel %vm857, %v975, %v896
        %v978 = vunpack.c.l.s4 1983009808
        %v979 = vunpack.c.0.s8 %v978
        %v980 = vperm.slane %v976, %v979
        %v981 = vrot.slane %v980, 4
        %v982 = vsel %vm857, %v981, %v974
        %v984 = vunpack.c.l.s4 1934713408
        %v985 = vunpack.c.0.s8 %v984
        %v986 = vperm.slane %v982, %v985
        %v987 = vrot.slane %v986, 4
        %v988 = vsel %vm857, 0, %v987
        %v989 = vsel %vm857, %v923, %v916
        %v991 = vunpack.c.l.s4 1983009808
        %v992 = vunpack.c.0.s8 %v991
        %v993 = vperm.slane %v989, %v992
        %v994 = vrot.slane %v924, 4
        %v995 = vsel %vm857, %v994, %v922
        %v997 = vunpack.c.l.s4 1983009808
        %v998 = vunpack.c.0.s8 %v997
        %v999 = vperm.slane %v995, %v998
        %v1000 = vrot.slane %v999, 4
        %v1001 = vsel %vm857, %v1000, %v993
        %v1003 = vunpack.c.l.s4 1934713408
        %v1004 = vunpack.c.0.s8 %v1003
        %v1005 = vperm.slane %v1001, %v1004
        %v1006 = vrot.slane %v1005, 4
        %v1007 = vsel %vm857, 0, %v1006
        %v1008 = vsel %vm857, %v949, %v942
        %v1010 = vunpack.c.l.s4 1983009808
        %v1011 = vunpack.c.0.s8 %v1010
        %v1012 = vperm.slane %v1008, %v1011
        %v1013 = vrot.slane %v950, 4
        %v1014 = vsel %vm857, %v1013, %v948
        %v1016 = vunpack.c.l.s4 1983009808
        %v1017 = vunpack.c.0.s8 %v1016
        %v1018 = vperm.slane %v1014, %v1017
        %v1019 = vrot.slane %v1018, 4
        %v1020 = vsel %vm857, %v1019, %v1012
        %v1022 = vunpack.c.l.s4 1934713408
        %v1023 = vunpack.c.0.s8 %v1022
        %v1024 = vperm.slane %v1020, %v1023
        %v1025 = vrot.slane %v1024, 4
        %v1026 = vsel %vm857, 0, %v1025
        %v1029 = vpack.i.b16 %v986, %v967
        %v1030 = vshrl.u32 %v967, 16
        %v1031 = vshrl.u32 %v986, 16
        %v1032 = vpack.i.b16 %v1031, %v1030
        %v1035 = vpack.i.b16 %v988, %v969
        %v1036 = vshrl.u32 %v969, 16
        %v1037 = vshrl.u32 %v988, 16
        %v1038 = vpack.i.b16 %v1037, %v1036
        %v1041 = vpack.i.b16 %v1024, %v1005
        %v1042 = vshrl.u32 %v1005, 16
        %v1043 = vshrl.u32 %v1024, 16
        %v1044 = vpack.i.b16 %v1043, %v1042
        %v1047 = vpack.i.b16 %v1026, %v1007
        %v1048 = vshrl.u32 %v1007, 16
        %v1049 = vshrl.u32 %v1026, 16
        %v1050 = vpack.i.b16 %v1049, %v1048
        %1051 = vrot.lane.b32.xlu0 %v806, 96
        %v1052 = vpop.permute.xlu0 %1051
        %1053 = vrot.lane.b32.xlu0 %v807, 96
        %v1054 = vpop.permute.xlu0 %1053
        %1055 = vrot.lane.b32.xlu0 %v811, 96
        %v1056 = vpop.permute.xlu0 %1055
        %1057 = vrot.lane.b32.xlu0 %v813, 96
        %v1058 = vpop.permute.xlu0 %1057
        %1059 = vrot.lane.b32.xlu0 %v815, 96
        %v1060 = vpop.permute.xlu0 %1059
        %1061 = vrot.lane.b32.xlu0 %v817, 96
        %v1062 = vpop.permute.xlu0 %1061
        %1063 = vrot.lane.b32.xlu0 %v819, 96
        %v1064 = vpop.permute.xlu0 %1063
        %1065 = vrot.lane.b32.xlu0 %v821, 96
        %v1066 = vpop.permute.xlu0 %1065
        %v1069 = vpack.i.b16 %v1056, %v1052
        %v1070 = vshrl.u32 %v1052, 16
        %v1071 = vshrl.u32 %v1056, 16
        %v1072 = vpack.i.b16 %v1071, %v1070
        %v1075 = vpack.i.b16 %v1064, %v1060
        %v1076 = vshrl.u32 %v1060, 16
        %v1077 = vshrl.u32 %v1064, 16
        %v1078 = vpack.i.b16 %v1077, %v1076
        %v1081 = vpack.i.b16 %v1058, %v1054
        %v1082 = vshrl.u32 %v1054, 16
        %v1083 = vshrl.u32 %v1058, 16
        %v1084 = vpack.i.b16 %v1083, %v1082
        %v1087 = vpack.i.b16 %v1066, %v1062
        %v1088 = vshrl.u32 %v1062, 16
        %v1089 = vshrl.u32 %v1066, 16
        %v1090 = vpack.i.b16 %v1089, %v1088
        %v1093 = vunpack.c.l.s4 1983009808
        %v1094 = vunpack.c.0.s8 %v1093
        %v1095 = vperm.slane %v1069, %v1094
        %v1098 = vunpack.c.l.s4 1983009808
        %v1099 = vunpack.c.0.s8 %v1098
        %v1100 = vperm.slane %v1075, %v1099
        %v1101 = vrot.slane %v1100, 4
        %v1102 = vsel %vm857, %v1101, %v1095
        %v1103 = vrot.slane %v1095, 4
        %v1104 = vsel %vm857, %v1100, %v1103
        %v1106 = vunpack.c.l.s4 1934713408
        %v1107 = vunpack.c.0.s8 %v1106
        %v1108 = vperm.slane %v1102, %v1107
        %v1110 = vunpack.c.l.s4 1934713408
        %v1111 = vunpack.c.0.s8 %v1110
        %v1112 = vperm.slane %v1104, %v1111
        %v1113 = vrot.slane %v1108, 4
        %v1114 = vsel %vm857, 0, %v1113
        %v1115 = vrot.slane %v1112, 4
        %v1116 = vsel %vm857, 0, %v1115
        %v1119 = vunpack.c.l.s4 1983009808
        %v1120 = vunpack.c.0.s8 %v1119
        %v1121 = vperm.slane %v1072, %v1120
        %v1124 = vunpack.c.l.s4 1983009808
        %v1125 = vunpack.c.0.s8 %v1124
        %v1126 = vperm.slane %v1078, %v1125
        %v1127 = vrot.slane %v1126, 4
        %v1128 = vsel %vm857, %v1127, %v1121
        %v1129 = vrot.slane %v1121, 4
        %v1130 = vsel %vm857, %v1126, %v1129
        %v1132 = vunpack.c.l.s4 1934713408
        %v1133 = vunpack.c.0.s8 %v1132
        %v1134 = vperm.slane %v1128, %v1133
        %v1136 = vunpack.c.l.s4 1934713408
        %v1137 = vunpack.c.0.s8 %v1136
        %v1138 = vperm.slane %v1130, %v1137
        %v1139 = vrot.slane %v1134, 4
        %v1140 = vsel %vm857, 0, %v1139
        %v1141 = vrot.slane %v1138, 4
        %v1142 = vsel %vm857, 0, %v1141
        %v1145 = vunpack.c.l.s4 1983009808
        %v1146 = vunpack.c.0.s8 %v1145
        %v1147 = vperm.slane %v1081, %v1146
        %v1150 = vunpack.c.l.s4 1983009808
        %v1151 = vunpack.c.0.s8 %v1150
        %v1152 = vperm.slane %v1087, %v1151
        %v1153 = vrot.slane %v1152, 4
        %v1154 = vsel %vm857, %v1153, %v1147
        %v1155 = vrot.slane %v1147, 4
        %v1156 = vsel %vm857, %v1152, %v1155
        %v1158 = vunpack.c.l.s4 1934713408
        %v1159 = vunpack.c.0.s8 %v1158
        %v1160 = vperm.slane %v1154, %v1159
        %v1162 = vunpack.c.l.s4 1934713408
        %v1163 = vunpack.c.0.s8 %v1162
        %v1164 = vperm.slane %v1156, %v1163
        %v1165 = vrot.slane %v1160, 4
        %v1166 = vsel %vm857, 0, %v1165
        %v1167 = vrot.slane %v1164, 4
        %v1168 = vsel %vm857, 0, %v1167
        %v1171 = vunpack.c.l.s4 1983009808
        %v1172 = vunpack.c.0.s8 %v1171
        %v1173 = vperm.slane %v1084, %v1172
        %v1176 = vunpack.c.l.s4 1983009808
        %v1177 = vunpack.c.0.s8 %v1176
        %v1178 = vperm.slane %v1090, %v1177
        %v1179 = vrot.slane %v1178, 4
        %v1180 = vsel %vm857, %v1179, %v1173
        %v1181 = vrot.slane %v1173, 4
        %v1182 = vsel %vm857, %v1178, %v1181
        %v1184 = vunpack.c.l.s4 1934713408
        %v1185 = vunpack.c.0.s8 %v1184
        %v1186 = vperm.slane %v1180, %v1185
        %v1188 = vunpack.c.l.s4 1934713408
        %v1189 = vunpack.c.0.s8 %v1188
        %v1190 = vperm.slane %v1182, %v1189
        %v1191 = vrot.slane %v1186, 4
        %v1192 = vsel %vm857, 0, %v1191
        %v1193 = vrot.slane %v1190, 4
        %v1194 = vsel %vm857, 0, %v1193
        %v1195 = vsel %vm857, %v1115, %v1108
        %v1197 = vunpack.c.l.s4 1983009808
        %v1198 = vunpack.c.0.s8 %v1197
        %v1199 = vperm.slane %v1195, %v1198
        %v1200 = vrot.slane %v1116, 4
        %v1201 = vsel %vm857, %v1200, %v1114
        %v1203 = vunpack.c.l.s4 1983009808
        %v1204 = vunpack.c.0.s8 %v1203
        %v1205 = vperm.slane %v1201, %v1204
        %v1206 = vrot.slane %v1205, 4
        %v1207 = vsel %vm857, %v1206, %v1199
        %v1209 = vunpack.c.l.s4 1934713408
        %v1210 = vunpack.c.0.s8 %v1209
        %v1211 = vperm.slane %v1207, %v1210
        %v1212 = vrot.slane %v1211, 4
        %v1213 = vsel %vm857, 0, %v1212
        %v1214 = vsel %vm857, %v1141, %v1134
        %v1216 = vunpack.c.l.s4 1983009808
        %v1217 = vunpack.c.0.s8 %v1216
        %v1218 = vperm.slane %v1214, %v1217
        %v1219 = vrot.slane %v1142, 4
        %v1220 = vsel %vm857, %v1219, %v1140
        %v1222 = vunpack.c.l.s4 1983009808
        %v1223 = vunpack.c.0.s8 %v1222
        %v1224 = vperm.slane %v1220, %v1223
        %v1225 = vrot.slane %v1224, 4
        %v1226 = vsel %vm857, %v1225, %v1218
        %v1228 = vunpack.c.l.s4 1934713408
        %v1229 = vunpack.c.0.s8 %v1228
        %v1230 = vperm.slane %v1226, %v1229
        %v1231 = vrot.slane %v1230, 4
        %v1232 = vsel %vm857, 0, %v1231
        %v1233 = vsel %vm857, %v1167, %v1160
        %v1235 = vunpack.c.l.s4 1983009808
        %v1236 = vunpack.c.0.s8 %v1235
        %v1237 = vperm.slane %v1233, %v1236
        %v1238 = vrot.slane %v1168, 4
        %v1239 = vsel %vm857, %v1238, %v1166
        %v1241 = vunpack.c.l.s4 1983009808
        %v1242 = vunpack.c.0.s8 %v1241
        %v1243 = vperm.slane %v1239, %v1242
        %v1244 = vrot.slane %v1243, 4
        %v1245 = vsel %vm857, %v1244, %v1237
        %v1247 = vunpack.c.l.s4 1934713408
        %v1248 = vunpack.c.0.s8 %v1247
        %v1249 = vperm.slane %v1245, %v1248
        %v1250 = vrot.slane %v1249, 4
        %v1251 = vsel %vm857, 0, %v1250
        %v1252 = vsel %vm857, %v1193, %v1186
        %v1254 = vunpack.c.l.s4 1983009808
        %v1255 = vunpack.c.0.s8 %v1254
        %v1256 = vperm.slane %v1252, %v1255
        %v1257 = vrot.slane %v1194, 4
        %v1258 = vsel %vm857, %v1257, %v1192
        %v1260 = vunpack.c.l.s4 1983009808
        %v1261 = vunpack.c.0.s8 %v1260
        %v1262 = vperm.slane %v1258, %v1261
        %v1263 = vrot.slane %v1262, 4
        %v1264 = vsel %vm857, %v1263, %v1256
        %v1266 = vunpack.c.l.s4 1934713408
        %v1267 = vunpack.c.0.s8 %v1266
        %v1268 = vperm.slane %v1264, %v1267
        %v1269 = vrot.slane %v1268, 4
        %v1270 = vsel %vm857, 0, %v1269
        %v1273 = vpack.i.b16 %v1230, %v1211
        %v1274 = vshrl.u32 %v1211, 16
        %v1275 = vshrl.u32 %v1230, 16
        %v1276 = vpack.i.b16 %v1275, %v1274
        %v1279 = vpack.i.b16 %v1232, %v1213
        %v1280 = vshrl.u32 %v1213, 16
        %v1281 = vshrl.u32 %v1232, 16
        %v1282 = vpack.i.b16 %v1281, %v1280
        %v1285 = vpack.i.b16 %v1268, %v1249
        %v1286 = vshrl.u32 %v1249, 16
        %v1287 = vshrl.u32 %v1268, 16
        %v1288 = vpack.i.b16 %v1287, %v1286
        %v1291 = vpack.i.b16 %v1270, %v1251
        %v1292 = vshrl.u32 %v1251, 16
        %v1293 = vshrl.u32 %v1270, 16
        %v1294 = vpack.i.b16 %v1293, %v1292
        %1295 = vrot.lane.b32.xlu0 %v806, 64
        %v1296 = vpop.permute.xlu0 %1295
        %1297 = vrot.lane.b32.xlu0 %v807, 64
        %v1298 = vpop.permute.xlu0 %1297
        %1299 = vrot.lane.b32.xlu0 %v811, 64
        %v1300 = vpop.permute.xlu0 %1299
        %1301 = vrot.lane.b32.xlu0 %v813, 64
        %v1302 = vpop.permute.xlu0 %1301
        %1303 = vrot.lane.b32.xlu0 %v815, 64
        %v1304 = vpop.permute.xlu0 %1303
        %1305 = vrot.lane.b32.xlu0 %v817, 64
        %v1306 = vpop.permute.xlu0 %1305
        %1307 = vrot.lane.b32.xlu0 %v819, 64
        %v1308 = vpop.permute.xlu0 %1307
        %1309 = vrot.lane.b32.xlu0 %v821, 64
        %v1310 = vpop.permute.xlu0 %1309
        %v1313 = vpack.i.b16 %v1300, %v1296
        %v1314 = vshrl.u32 %v1296, 16
        %v1315 = vshrl.u32 %v1300, 16
        %v1316 = vpack.i.b16 %v1315, %v1314
        %v1319 = vpack.i.b16 %v1308, %v1304
        %v1320 = vshrl.u32 %v1304, 16
        %v1321 = vshrl.u32 %v1308, 16
        %v1322 = vpack.i.b16 %v1321, %v1320
        %v1325 = vpack.i.b16 %v1302, %v1298
        %v1326 = vshrl.u32 %v1298, 16
        %v1327 = vshrl.u32 %v1302, 16
        %v1328 = vpack.i.b16 %v1327, %v1326
        %v1331 = vpack.i.b16 %v1310, %v1306
        %v1332 = vshrl.u32 %v1306, 16
        %v1333 = vshrl.u32 %v1310, 16
        %v1334 = vpack.i.b16 %v1333, %v1332
        %v1337 = vunpack.c.l.s4 1983009808
        %v1338 = vunpack.c.0.s8 %v1337
        %v1339 = vperm.slane %v1313, %v1338
        %v1342 = vunpack.c.l.s4 1983009808
        %v1343 = vunpack.c.0.s8 %v1342
        %v1344 = vperm.slane %v1319, %v1343
        %v1345 = vrot.slane %v1344, 4
        %v1346 = vsel %vm857, %v1345, %v1339
        %v1347 = vrot.slane %v1339, 4
        %v1348 = vsel %vm857, %v1344, %v1347
        %v1350 = vunpack.c.l.s4 1934713408
        %v1351 = vunpack.c.0.s8 %v1350
        %v1352 = vperm.slane %v1346, %v1351
        %v1354 = vunpack.c.l.s4 1934713408
        %v1355 = vunpack.c.0.s8 %v1354
        %v1356 = vperm.slane %v1348, %v1355
        %v1357 = vrot.slane %v1352, 4
        %v1358 = vsel %vm857, 0, %v1357
        %v1359 = vrot.slane %v1356, 4
        %v1360 = vsel %vm857, 0, %v1359
        %v1363 = vunpack.c.l.s4 1983009808
        %v1364 = vunpack.c.0.s8 %v1363
        %v1365 = vperm.slane %v1316, %v1364
        %v1368 = vunpack.c.l.s4 1983009808
        %v1369 = vunpack.c.0.s8 %v1368
        %v1370 = vperm.slane %v1322, %v1369
        %v1371 = vrot.slane %v1370, 4
        %v1372 = vsel %vm857, %v1371, %v1365
        %v1373 = vrot.slane %v1365, 4
        %v1374 = vsel %vm857, %v1370, %v1373
        %v1376 = vunpack.c.l.s4 1934713408
        %v1377 = vunpack.c.0.s8 %v1376
        %v1378 = vperm.slane %v1372, %v1377
        %v1380 = vunpack.c.l.s4 1934713408
        %v1381 = vunpack.c.0.s8 %v1380
        %v1382 = vperm.slane %v1374, %v1381
        %v1383 = vrot.slane %v1378, 4
        %v1384 = vsel %vm857, 0, %v1383
        %v1385 = vrot.slane %v1382, 4
        %v1386 = vsel %vm857, 0, %v1385
        %v1389 = vunpack.c.l.s4 1983009808
        %v1390 = vunpack.c.0.s8 %v1389
        %v1391 = vperm.slane %v1325, %v1390
        %v1394 = vunpack.c.l.s4 1983009808
        %v1395 = vunpack.c.0.s8 %v1394
        %v1396 = vperm.slane %v1331, %v1395
        %v1397 = vrot.slane %v1396, 4
        %v1398 = vsel %vm857, %v1397, %v1391
        %v1399 = vrot.slane %v1391, 4
        %v1400 = vsel %vm857, %v1396, %v1399
        %v1402 = vunpack.c.l.s4 1934713408
        %v1403 = vunpack.c.0.s8 %v1402
        %v1404 = vperm.slane %v1398, %v1403
        %v1406 = vunpack.c.l.s4 1934713408
        %v1407 = vunpack.c.0.s8 %v1406
        %v1408 = vperm.slane %v1400, %v1407
        %v1409 = vrot.slane %v1404, 4
        %v1410 = vsel %vm857, 0, %v1409
        %v1411 = vrot.slane %v1408, 4
        %v1412 = vsel %vm857, 0, %v1411
        %v1415 = vunpack.c.l.s4 1983009808
        %v1416 = vunpack.c.0.s8 %v1415
        %v1417 = vperm.slane %v1328, %v1416
        %v1420 = vunpack.c.l.s4 1983009808
        %v1421 = vunpack.c.0.s8 %v1420
        %v1422 = vperm.slane %v1334, %v1421
        %v1423 = vrot.slane %v1422, 4
        %v1424 = vsel %vm857, %v1423, %v1417
        %v1425 = vrot.slane %v1417, 4
        %v1426 = vsel %vm857, %v1422, %v1425
        %v1428 = vunpack.c.l.s4 1934713408
        %v1429 = vunpack.c.0.s8 %v1428
        %v1430 = vperm.slane %v1424, %v1429
        %v1432 = vunpack.c.l.s4 1934713408
        %v1433 = vunpack.c.0.s8 %v1432
        %v1434 = vperm.slane %v1426, %v1433
        %v1435 = vrot.slane %v1430, 4
        %v1436 = vsel %vm857, 0, %v1435
        %v1437 = vrot.slane %v1434, 4
        %v1438 = vsel %vm857, 0, %v1437
        %v1439 = vsel %vm857, %v1359, %v1352
        %v1441 = vunpack.c.l.s4 1983009808
        %v1442 = vunpack.c.0.s8 %v1441
        %v1443 = vperm.slane %v1439, %v1442
        %v1444 = vrot.slane %v1360, 4
        %v1445 = vsel %vm857, %v1444, %v1358
        %v1447 = vunpack.c.l.s4 1983009808
        %v1448 = vunpack.c.0.s8 %v1447
        %v1449 = vperm.slane %v1445, %v1448
        %v1450 = vrot.slane %v1449, 4
        %v1451 = vsel %vm857, %v1450, %v1443
        %v1453 = vunpack.c.l.s4 1934713408
        %v1454 = vunpack.c.0.s8 %v1453
        %v1455 = vperm.slane %v1451, %v1454
        %v1456 = vrot.slane %v1455, 4
        %v1457 = vsel %vm857, 0, %v1456
        %v1458 = vsel %vm857, %v1385, %v1378
        %v1460 = vunpack.c.l.s4 1983009808
        %v1461 = vunpack.c.0.s8 %v1460
        %v1462 = vperm.slane %v1458, %v1461
        %v1463 = vrot.slane %v1386, 4
        %v1464 = vsel %vm857, %v1463, %v1384
        %v1466 = vunpack.c.l.s4 1983009808
        %v1467 = vunpack.c.0.s8 %v1466
        %v1468 = vperm.slane %v1464, %v1467
        %v1469 = vrot.slane %v1468, 4
        %v1470 = vsel %vm857, %v1469, %v1462
        %v1472 = vunpack.c.l.s4 1934713408
        %v1473 = vunpack.c.0.s8 %v1472
        %v1474 = vperm.slane %v1470, %v1473
        %v1475 = vrot.slane %v1474, 4
        %v1476 = vsel %vm857, 0, %v1475
        %v1477 = vsel %vm857, %v1411, %v1404
        %v1479 = vunpack.c.l.s4 1983009808
        %v1480 = vunpack.c.0.s8 %v1479
        %v1481 = vperm.slane %v1477, %v1480
        %v1482 = vrot.slane %v1412, 4
        %v1483 = vsel %vm857, %v1482, %v1410
        %v1485 = vunpack.c.l.s4 1983009808
        %v1486 = vunpack.c.0.s8 %v1485
        %v1487 = vperm.slane %v1483, %v1486
        %v1488 = vrot.slane %v1487, 4
        %v1489 = vsel %vm857, %v1488, %v1481
        %v1491 = vunpack.c.l.s4 1934713408
        %v1492 = vunpack.c.0.s8 %v1491
        %v1493 = vperm.slane %v1489, %v1492
        %v1494 = vrot.slane %v1493, 4
        %v1495 = vsel %vm857, 0, %v1494
        %v1496 = vsel %vm857, %v1437, %v1430
        %v1498 = vunpack.c.l.s4 1983009808
        %v1499 = vunpack.c.0.s8 %v1498
        %v1500 = vperm.slane %v1496, %v1499
        %v1501 = vrot.slane %v1438, 4
        %v1502 = vsel %vm857, %v1501, %v1436
        %v1504 = vunpack.c.l.s4 1983009808
        %v1505 = vunpack.c.0.s8 %v1504
        %v1506 = vperm.slane %v1502, %v1505
        %v1507 = vrot.slane %v1506, 4
        %v1508 = vsel %vm857, %v1507, %v1500
        %v1510 = vunpack.c.l.s4 1934713408
        %v1511 = vunpack.c.0.s8 %v1510
        %v1512 = vperm.slane %v1508, %v1511
        %v1513 = vrot.slane %v1512, 4
        %v1514 = vsel %vm857, 0, %v1513
        %v1517 = vpack.i.b16 %v1474, %v1455
        %v1518 = vshrl.u32 %v1455, 16
        %v1519 = vshrl.u32 %v1474, 16
        %v1520 = vpack.i.b16 %v1519, %v1518
        %v1523 = vpack.i.b16 %v1476, %v1457
        %v1524 = vshrl.u32 %v1457, 16
        %v1525 = vshrl.u32 %v1476, 16
        %v1526 = vpack.i.b16 %v1525, %v1524
        %v1529 = vpack.i.b16 %v1512, %v1493
        %v1530 = vshrl.u32 %v1493, 16
        %v1531 = vshrl.u32 %v1512, 16
        %v1532 = vpack.i.b16 %v1531, %v1530
        %v1535 = vpack.i.b16 %v1514, %v1495
        %v1536 = vshrl.u32 %v1495, 16
        %v1537 = vshrl.u32 %v1514, 16
        %v1538 = vpack.i.b16 %v1537, %v1536
        %v1539 = vld [vmem:[%s717] sm:$0xff]
        %v1540 = vld [vmem:[%s717 + $0x8] sm:$0xff]
        %vm1541 = vcmask 64512
        %v1543 = vsel %vm1541, %v1029, 0
        %v1546 = vsel %vm1541, %v1273, 0
        %1548 = vmatpush.bf16.xpose.msra.mxu0 0
        %1549 = vmatpush.bf16.xpose.msra.mxu0 0
        %1550 = vmatpush.bf16.xpose.msra.mxu0 0
        %1551 = vmatpush.bf16.xpose.msra.mxu0 0
        %1552 = vmatpush.bf16.xpose.msra.mxu0 0
        %1553 = vmatpush.bf16.xpose.msra.mxu0 0
        %1554 = vmatpush.bf16.xpose.msra.mxu0 0
        %1555 = vmatpush.bf16.xpose.msra.mxu0 %v1546
        %1556 = vmatmul.bf16.gmra.mxu0 %v1543
        %v1557 = vpop.f32.mrf.mxu0
        %v1558 = vadd.f32 0.0, %v1557
        %v1559 = vpop.f32.mrf.mxu0
        %1560 = vdwg.mxu0
        %v1562 = vsel %vm1541, %v1032, 0
        %v1565 = vsel %vm1541, %v1276, 0
        %1567 = vmatpush.bf16.xpose.msra.mxu0 0
        %1568 = vmatpush.bf16.xpose.msra.mxu0 0
        %1569 = vmatpush.bf16.xpose.msra.mxu0 0
        %1570 = vmatpush.bf16.xpose.msra.mxu0 0
        %1571 = vmatpush.bf16.xpose.msra.mxu0 0
        %1572 = vmatpush.bf16.xpose.msra.mxu0 0
        %1573 = vmatpush.bf16.xpose.msra.mxu0 0
        %1574 = vmatpush.bf16.xpose.msra.mxu0 %v1565
        %1575 = vmatmul.bf16.gmra.mxu0 %v1562
        %v1576 = vpop.f32.mrf.mxu0
        %v1577 = vadd.f32 0.0, %v1576
        %v1578 = vpop.f32.mrf.mxu0
        %1579 = vdwg.mxu0
        %v1581 = vsel %vm1541, %v1035, 0
        %v1584 = vsel %vm1541, %v1279, 0
        %1586 = vmatpush.bf16.xpose.msra.mxu0 0
        %1587 = vmatpush.bf16.xpose.msra.mxu0 0
        %1588 = vmatpush.bf16.xpose.msra.mxu0 0
        %1589 = vmatpush.bf16.xpose.msra.mxu0 0
        %1590 = vmatpush.bf16.xpose.msra.mxu0 0
        %1591 = vmatpush.bf16.xpose.msra.mxu0 0
        %1592 = vmatpush.bf16.xpose.msra.mxu0 0
        %1593 = vmatpush.bf16.xpose.msra.mxu0 %v1584
        %1594 = vmatmul.bf16.gmra.mxu0 %v1581
        %v1595 = vpop.f32.mrf.mxu0
        %v1596 = vadd.f32 0.0, %v1595
        %v1597 = vpop.f32.mrf.mxu0
        %1598 = vdwg.mxu0
        %v1600 = vsel %vm1541, %v1038, 0
        %v1603 = vsel %vm1541, %v1282, 0
        %1605 = vmatpush.bf16.xpose.msra.mxu0 0
        %1606 = vmatpush.bf16.xpose.msra.mxu0 0
        %1607 = vmatpush.bf16.xpose.msra.mxu0 0
        %1608 = vmatpush.bf16.xpose.msra.mxu0 0
        %1609 = vmatpush.bf16.xpose.msra.mxu0 0
        %1610 = vmatpush.bf16.xpose.msra.mxu0 0
        %1611 = vmatpush.bf16.xpose.msra.mxu0 0
        %1612 = vmatpush.bf16.xpose.msra.mxu0 %v1603
        %1613 = vmatmul.bf16.gmra.mxu0 %v1600
        %v1614 = vpop.f32.mrf.mxu0
        %v1615 = vadd.f32 0.0, %v1614
        %v1616 = vpop.f32.mrf.mxu0
        %1617 = vdwg.mxu0
        %v1619 = vsel %vm1541, %v1041, 0
        %v1622 = vsel %vm1541, %v1285, 0
        %1624 = vmatpush.bf16.xpose.msra.mxu0 0
        %1625 = vmatpush.bf16.xpose.msra.mxu0 0
        %1626 = vmatpush.bf16.xpose.msra.mxu0 0
        %1627 = vmatpush.bf16.xpose.msra.mxu0 0
        %1628 = vmatpush.bf16.xpose.msra.mxu0 0
        %1629 = vmatpush.bf16.xpose.msra.mxu0 0
        %1630 = vmatpush.bf16.xpose.msra.mxu0 0
        %1631 = vmatpush.bf16.xpose.msra.mxu0 %v1622
        %1632 = vmatmul.bf16.gmra.mxu0 %v1619
        %v1633 = vpop.f32.mrf.mxu0
        %v1634 = vadd.f32 0.0, %v1633
        %v1635 = vpop.f32.mrf.mxu0
        %1636 = vdwg.mxu0
        %v1638 = vsel %vm1541, %v1044, 0
        %v1641 = vsel %vm1541, %v1288, 0
        %1643 = vmatpush.bf16.xpose.msra.mxu0 0
        %1644 = vmatpush.bf16.xpose.msra.mxu0 0
        %1645 = vmatpush.bf16.xpose.msra.mxu0 0
        %1646 = vmatpush.bf16.xpose.msra.mxu0 0
        %1647 = vmatpush.bf16.xpose.msra.mxu0 0
        %1648 = vmatpush.bf16.xpose.msra.mxu0 0
        %1649 = vmatpush.bf16.xpose.msra.mxu0 0
        %1650 = vmatpush.bf16.xpose.msra.mxu0 %v1641
        %1651 = vmatmul.bf16.gmra.mxu0 %v1638
        %v1652 = vpop.f32.mrf.mxu0
        %v1653 = vadd.f32 0.0, %v1652
        %v1654 = vpop.f32.mrf.mxu0
        %1655 = vdwg.mxu0
        %v1657 = vsel %vm1541, %v1047, 0
        %v1660 = vsel %vm1541, %v1291, 0
        %1662 = vmatpush.bf16.xpose.msra.mxu0 0
        %1663 = vmatpush.bf16.xpose.msra.mxu0 0
        %1664 = vmatpush.bf16.xpose.msra.mxu0 0
        %1665 = vmatpush.bf16.xpose.msra.mxu0 0
        %1666 = vmatpush.bf16.xpose.msra.mxu0 0
        %1667 = vmatpush.bf16.xpose.msra.mxu0 0
        %1668 = vmatpush.bf16.xpose.msra.mxu0 0
        %1669 = vmatpush.bf16.xpose.msra.mxu0 %v1660
        %1670 = vmatmul.bf16.gmra.mxu0 %v1657
        %v1671 = vpop.f32.mrf.mxu0
        %v1672 = vadd.f32 0.0, %v1671
        %v1673 = vpop.f32.mrf.mxu0
        %1674 = vdwg.mxu0
        %v1676 = vsel %vm1541, %v1050, 0
        %v1679 = vsel %vm1541, %v1294, 0
        %1681 = vmatpush.bf16.xpose.msra.mxu0 0
        %1682 = vmatpush.bf16.xpose.msra.mxu0 0
        %1683 = vmatpush.bf16.xpose.msra.mxu0 0
        %1684 = vmatpush.bf16.xpose.msra.mxu0 0
        %1685 = vmatpush.bf16.xpose.msra.mxu0 0
        %1686 = vmatpush.bf16.xpose.msra.mxu0 0
        %1687 = vmatpush.bf16.xpose.msra.mxu0 0
        %1688 = vmatpush.bf16.xpose.msra.mxu0 %v1679
        %1689 = vmatmul.bf16.gmra.mxu0 %v1676
        %v1690 = vpop.f32.mrf.mxu0
        %v1691 = vadd.f32 0.0, %v1690
        %v1692 = vpop.f32.mrf.mxu0
        %1693 = vdwg.mxu0
        %v1694 = vadd.f32 %v1558, %v1539
        %v1695 = vadd.f32 %v1577, %v1539
        %v1696 = vadd.f32 %v1596, %v1539
        %v1697 = vadd.f32 %v1615, %v1539
        %v1698 = vadd.f32 %v1634, %v1540
        %v1699 = vadd.f32 %v1653, %v1540
        %v1700 = vadd.f32 %v1672, %v1540
        %v1701 = vadd.f32 %v1691, %v1540
        %v1702 = vsel %vm1541, %v1694, -inf
        %1703 = vmax.xlane.f32.xlu0 %v1702
        %v1704 = vpop.xlane.xlu0 %1703
        %v1705 = vsel %vm1541, %v1695, -inf
        %1706 = vmax.xlane.f32.xlu0 %v1705
        %v1707 = vpop.xlane.xlu0 %1706
        %v1708 = vsel %vm1541, %v1696, -inf
        %1709 = vmax.xlane.f32.xlu0 %v1708
        %v1710 = vpop.xlane.xlu0 %1709
        %v1711 = vsel %vm1541, %v1697, -inf
        %1712 = vmax.xlane.f32.xlu0 %v1711
        %v1713 = vpop.xlane.xlu0 %1712
        %v1714 = vsel %vm1541, %v1698, -inf
        %1715 = vmax.xlane.f32.xlu0 %v1714
        %v1716 = vpop.xlane.xlu0 %1715
        %v1717 = vsel %vm1541, %v1699, -inf
        %1718 = vmax.xlane.f32.xlu0 %v1717
        %v1719 = vpop.xlane.xlu0 %1718
        %v1720 = vsel %vm1541, %v1700, -inf
        %1721 = vmax.xlane.f32.xlu0 %v1720
        %v1722 = vpop.xlane.xlu0 %1721
        %v1723 = vsel %vm1541, %v1701, -inf
        %1724 = vmax.xlane.f32.xlu0 %v1723
        %v1725 = vpop.xlane.xlu0 %1724
        %v1726 = vsub.f32 %v1694, %v1704
        %v1727 = vsub.f32 %v1695, %v1707
        %v1728 = vsub.f32 %v1696, %v1710
        %v1729 = vsub.f32 %v1697, %v1713
        %v1730 = vsub.f32 %v1698, %v1716
        %v1731 = vsub.f32 %v1699, %v1719
        %v1732 = vsub.f32 %v1700, %v1722
        %v1733 = vsub.f32 %v1701, %v1725
        %v1734 = vmul.f32 %v1726, 1.442695
        %v1735 = vpow.pop %v1734
        %v1736 = vmul.f32 %v1727, 1.442695
        %v1737 = vpow.pop %v1736
        %v1738 = vmul.f32 %v1728, 1.442695
        %v1739 = vpow.pop %v1738
        %v1740 = vmul.f32 %v1729, 1.442695
        %v1741 = vpow.pop %v1740
        %v1742 = vmul.f32 %v1730, 1.442695
        %v1743 = vpow.pop %v1742
        %v1744 = vmul.f32 %v1731, 1.442695
        %v1745 = vpow.pop %v1744
        %v1746 = vmul.f32 %v1732, 1.442695
        %v1747 = vpow.pop %v1746
        %v1748 = vmul.f32 %v1733, 1.442695
        %v1749 = vpow.pop %v1748
        %v1750 = vsel %vm1541, %v1735, 0.0
        %1751 = vadd.xlane.f32.xlu0 %v1750
        %v1752 = vpop.xlane.xlu0 %1751
        %v1753 = vsel %vm1541, %v1737, 0.0
        %1754 = vadd.xlane.f32.xlu0 %v1753
        %v1755 = vpop.xlane.xlu0 %1754
        %v1756 = vsel %vm1541, %v1739, 0.0
        %1757 = vadd.xlane.f32.xlu0 %v1756
        %v1758 = vpop.xlane.xlu0 %1757
        %v1759 = vsel %vm1541, %v1741, 0.0
        %1760 = vadd.xlane.f32.xlu0 %v1759
        %v1761 = vpop.xlane.xlu0 %1760
        %v1762 = vsel %vm1541, %v1743, 0.0
        %1763 = vadd.xlane.f32.xlu0 %v1762
        %v1764 = vpop.xlane.xlu0 %1763
        %v1765 = vsel %vm1541, %v1745, 0.0
        %1766 = vadd.xlane.f32.xlu0 %v1765
        %v1767 = vpop.xlane.xlu0 %1766
        %v1768 = vsel %vm1541, %v1747, 0.0
        %1769 = vadd.xlane.f32.xlu0 %v1768
        %v1770 = vpop.xlane.xlu0 %1769
        %v1771 = vsel %vm1541, %v1749, 0.0
        %1772 = vadd.xlane.f32.xlu0 %v1771
        %v1773 = vpop.xlane.xlu0 %1772
        %v1774 = vrcp.pop %v1752
        %v1775 = vrcp.pop %v1755
        %v1776 = vrcp.pop %v1758
        %v1777 = vrcp.pop %v1761
        %v1778 = vrcp.pop %v1764
        %v1779 = vrcp.pop %v1767
        %v1780 = vrcp.pop %v1770
        %v1781 = vrcp.pop %v1773
        %v1782 = vmul.f32 %v1735, %v1774
        %v1783 = vmul.f32 %v1737, %v1775
        %v1784 = vmul.f32 %v1739, %v1776
        %v1785 = vmul.f32 %v1741, %v1777
        %v1786 = vmul.f32 %v1743, %v1778
        %v1787 = vmul.f32 %v1745, %v1779
        %v1788 = vmul.f32 %v1747, %v1780
        %v1789 = vmul.f32 %v1749, %v1781
        %v1790 = vpack.c.bf16 %v1782, %v1782
        %v1791 = vpack.c.bf16 %v1783, %v1783
        %v1792 = vpack.c.bf16 %v1784, %v1784
        %v1793 = vpack.c.bf16 %v1785, %v1785
        %v1794 = vpack.c.bf16 %v1786, %v1786
        %v1795 = vpack.c.bf16 %v1787, %v1787
        %v1796 = vpack.c.bf16 %v1788, %v1788
        %v1797 = vpack.c.bf16 %v1789, %v1789
        %v1799 = vsel %vm1541, %v1790, 0
        %vm1801 = vcmask 1043456
        %v1803 = vsel %vm1801, %v1517, 0
        %1805 = vmatpush.bf16.msra.mxu0 0
        %1806 = vmatpush.bf16.msra.mxu0 0
        %1807 = vmatpush.bf16.msra.mxu0 0
        %1808 = vmatpush.bf16.msra.mxu0 0
        %1809 = vmatpush.bf16.msra.mxu0 0
        %1810 = vmatpush.bf16.msra.mxu0 0
        %1811 = vmatpush.bf16.msra.mxu0 0
        %1812 = vmatpush.bf16.msra.mxu0 %v1803
        %1813 = vmatmul.bf16.gmra.mxu0 %v1799
        %v1814 = vpop.f32.mrf.mxu0
        %v1815 = vadd.f32 0.0, %v1814
        %v1816 = vpop.f32.mrf.mxu0
        %1817 = vdwg.mxu0
        %v1819 = vsel %vm1541, %v1791, 0
        %v1822 = vsel %vm1801, %v1520, 0
        %1824 = vmatpush.bf16.msra.mxu0 0
        %1825 = vmatpush.bf16.msra.mxu0 0
        %1826 = vmatpush.bf16.msra.mxu0 0
        %1827 = vmatpush.bf16.msra.mxu0 0
        %1828 = vmatpush.bf16.msra.mxu0 0
        %1829 = vmatpush.bf16.msra.mxu0 0
        %1830 = vmatpush.bf16.msra.mxu0 0
        %1831 = vmatpush.bf16.msra.mxu0 %v1822
        %1832 = vmatmul.bf16.gmra.mxu0 %v1819
        %v1833 = vpop.f32.mrf.mxu0
        %v1834 = vadd.f32 0.0, %v1833
        %v1835 = vpop.f32.mrf.mxu0
        %1836 = vdwg.mxu0
        %v1838 = vsel %vm1541, %v1792, 0
        %v1841 = vsel %vm1801, %v1523, 0
        %1843 = vmatpush.bf16.msra.mxu0 0
        %1844 = vmatpush.bf16.msra.mxu0 0
        %1845 = vmatpush.bf16.msra.mxu0 0
        %1846 = vmatpush.bf16.msra.mxu0 0
        %1847 = vmatpush.bf16.msra.mxu0 0
        %1848 = vmatpush.bf16.msra.mxu0 0
        %1849 = vmatpush.bf16.msra.mxu0 0
        %1850 = vmatpush.bf16.msra.mxu0 %v1841
        %1851 = vmatmul.bf16.gmra.mxu0 %v1838
        %v1852 = vpop.f32.mrf.mxu0
        %v1853 = vadd.f32 0.0, %v1852
        %v1854 = vpop.f32.mrf.mxu0
        %1855 = vdwg.mxu0
        %v1857 = vsel %vm1541, %v1793, 0
        %v1860 = vsel %vm1801, %v1526, 0
        %1862 = vmatpush.bf16.msra.mxu0 0
        %1863 = vmatpush.bf16.msra.mxu0 0
        %1864 = vmatpush.bf16.msra.mxu0 0
        %1865 = vmatpush.bf16.msra.mxu0 0
        %1866 = vmatpush.bf16.msra.mxu0 0
        %1867 = vmatpush.bf16.msra.mxu0 0
        %1868 = vmatpush.bf16.msra.mxu0 0
        %1869 = vmatpush.bf16.msra.mxu0 %v1860
        %1870 = vmatmul.bf16.gmra.mxu0 %v1857
        %v1871 = vpop.f32.mrf.mxu0
        %v1872 = vadd.f32 0.0, %v1871
        %v1873 = vpop.f32.mrf.mxu0
        %1874 = vdwg.mxu0
        %v1876 = vsel %vm1541, %v1794, 0
        %v1879 = vsel %vm1801, %v1529, 0
        %1881 = vmatpush.bf16.msra.mxu0 0
        %1882 = vmatpush.bf16.msra.mxu0 0
        %1883 = vmatpush.bf16.msra.mxu0 0
        %1884 = vmatpush.bf16.msra.mxu0 0
        %1885 = vmatpush.bf16.msra.mxu0 0
        %1886 = vmatpush.bf16.msra.mxu0 0
        %1887 = vmatpush.bf16.msra.mxu0 0
        %1888 = vmatpush.bf16.msra.mxu0 %v1879
        %1889 = vmatmul.bf16.gmra.mxu0 %v1876
        %v1890 = vpop.f32.mrf.mxu0
        %v1891 = vadd.f32 0.0, %v1890
        %v1892 = vpop.f32.mrf.mxu0
        %1893 = vdwg.mxu0
        %v1895 = vsel %vm1541, %v1795, 0
        %v1898 = vsel %vm1801, %v1532, 0
        %1900 = vmatpush.bf16.msra.mxu0 0
        %1901 = vmatpush.bf16.msra.mxu0 0
        %1902 = vmatpush.bf16.msra.mxu0 0
        %1903 = vmatpush.bf16.msra.mxu0 0
        %1904 = vmatpush.bf16.msra.mxu0 0
        %1905 = vmatpush.bf16.msra.mxu0 0
        %1906 = vmatpush.bf16.msra.mxu0 0
        %1907 = vmatpush.bf16.msra.mxu0 %v1898
        %1908 = vmatmul.bf16.gmra.mxu0 %v1895
        %v1909 = vpop.f32.mrf.mxu0
        %v1910 = vadd.f32 0.0, %v1909
        %v1911 = vpop.f32.mrf.mxu0
        %1912 = vdwg.mxu0
        %v1914 = vsel %vm1541, %v1796, 0
        %v1917 = vsel %vm1801, %v1535, 0
        %1919 = vmatpush.bf16.msra.mxu0 0
        %1920 = vmatpush.bf16.msra.mxu0 0
        %1921 = vmatpush.bf16.msra.mxu0 0
        %1922 = vmatpush.bf16.msra.mxu0 0
        %1923 = vmatpush.bf16.msra.mxu0 0
        %1924 = vmatpush.bf16.msra.mxu0 0
        %1925 = vmatpush.bf16.msra.mxu0 0
        %1926 = vmatpush.bf16.msra.mxu0 %v1917
        %1927 = vmatmul.bf16.gmra.mxu0 %v1914
        %v1928 = vpop.f32.mrf.mxu0
        %v1929 = vadd.f32 0.0, %v1928
        %v1930 = vpop.f32.mrf.mxu0
        %1931 = vdwg.mxu0
        %v1933 = vsel %vm1541, %v1797, 0
        %v1936 = vsel %vm1801, %v1538, 0
        %1938 = vmatpush.bf16.msra.mxu0 0
        %1939 = vmatpush.bf16.msra.mxu0 0
        %1940 = vmatpush.bf16.msra.mxu0 0
        %1941 = vmatpush.bf16.msra.mxu0 0
        %1942 = vmatpush.bf16.msra.mxu0 0
        %1943 = vmatpush.bf16.msra.mxu0 0
        %1944 = vmatpush.bf16.msra.mxu0 0
        %1945 = vmatpush.bf16.msra.mxu0 %v1936
        %1946 = vmatmul.bf16.gmra.mxu0 %v1933
        %v1947 = vpop.f32.mrf.mxu0
        %v1948 = vadd.f32 0.0, %v1947
        %v1949 = vpop.f32.mrf.mxu0
        %1950 = vdwg.mxu0
        %v1951 = vpack.c.bf16 %v1815, %v1815
        %v1952 = vpack.c.bf16 %v1834, %v1834
        %v1953 = vpack.c.bf16 %v1853, %v1853
        %v1954 = vpack.c.bf16 %v1872, %v1872
        %v1955 = vpack.c.bf16 %v1891, %v1891
        %v1956 = vpack.c.bf16 %v1910, %v1910
        %v1957 = vpack.c.bf16 %v1929, %v1929
        %v1958 = vpack.c.bf16 %v1948, %v1948
        %v1961 = vpack.i.b16 %v1952, %v1951
        %v1962 = vshrl.u32 %v1951, 16
        %v1963 = vshrl.u32 %v1952, 16
        %v1964 = vpack.i.b16 %v1963, %v1962
        %v1967 = vpack.i.b16 %v1954, %v1953
        %v1968 = vshrl.u32 %v1953, 16
        %v1969 = vshrl.u32 %v1954, 16
        %v1970 = vpack.i.b16 %v1969, %v1968
        %v1973 = vpack.i.b16 %v1956, %v1955
        %v1974 = vshrl.u32 %v1955, 16
        %v1975 = vshrl.u32 %v1956, 16
        %v1976 = vpack.i.b16 %v1975, %v1974
        %v1979 = vpack.i.b16 %v1958, %v1957
        %v1980 = vshrl.u32 %v1957, 16
        %v1981 = vshrl.u32 %v1958, 16
        %v1982 = vpack.i.b16 %v1981, %v1980
        %v1985 = vunpack.c.l.s4 1983009808
        %v1986 = vunpack.c.0.s8 %v1985
        %v1987 = vperm.slane %v1961, %v1986
        %v1990 = vunpack.c.l.s4 1983009808
        %v1991 = vunpack.c.0.s8 %v1990
        %v1992 = vperm.slane %v1967, %v1991
        %v1993 = vrot.slane %v1992, 4
        %v1994 = vsel %vm857, %v1993, %v1987
        %v1995 = vrot.slane %v1987, 4
        %v1996 = vsel %vm857, %v1992, %v1995
        %v1998 = vunpack.c.l.s4 1934713408
        %v1999 = vunpack.c.0.s8 %v1998
        %v2000 = vperm.slane %v1994, %v1999
        %v2002 = vunpack.c.l.s4 1934713408
        %v2003 = vunpack.c.0.s8 %v2002
        %v2004 = vperm.slane %v1996, %v2003
        %v2005 = vrot.slane %v2000, 4
        %v2006 = vsel %vm857, 0, %v2005
        %v2007 = vrot.slane %v2004, 4
        %v2008 = vsel %vm857, 0, %v2007
        %v2011 = vunpack.c.l.s4 1983009808
        %v2012 = vunpack.c.0.s8 %v2011
        %v2013 = vperm.slane %v1964, %v2012
        %v2016 = vunpack.c.l.s4 1983009808
        %v2017 = vunpack.c.0.s8 %v2016
        %v2018 = vperm.slane %v1970, %v2017
        %v2019 = vrot.slane %v2018, 4
        %v2020 = vsel %vm857, %v2019, %v2013
        %v2021 = vrot.slane %v2013, 4
        %v2022 = vsel %vm857, %v2018, %v2021
        %v2024 = vunpack.c.l.s4 1934713408
        %v2025 = vunpack.c.0.s8 %v2024
        %v2026 = vperm.slane %v2020, %v2025
        %v2028 = vunpack.c.l.s4 1934713408
        %v2029 = vunpack.c.0.s8 %v2028
        %v2030 = vperm.slane %v2022, %v2029
        %v2031 = vrot.slane %v2026, 4
        %v2032 = vsel %vm857, 0, %v2031
        %v2033 = vrot.slane %v2030, 4
        %v2034 = vsel %vm857, 0, %v2033
        %v2037 = vunpack.c.l.s4 1983009808
        %v2038 = vunpack.c.0.s8 %v2037
        %v2039 = vperm.slane %v1973, %v2038
        %v2042 = vunpack.c.l.s4 1983009808
        %v2043 = vunpack.c.0.s8 %v2042
        %v2044 = vperm.slane %v1979, %v2043
        %v2045 = vrot.slane %v2044, 4
        %v2046 = vsel %vm857, %v2045, %v2039
        %v2047 = vrot.slane %v2039, 4
        %v2048 = vsel %vm857, %v2044, %v2047
        %v2050 = vunpack.c.l.s4 1934713408
        %v2051 = vunpack.c.0.s8 %v2050
        %v2052 = vperm.slane %v2046, %v2051
        %v2054 = vunpack.c.l.s4 1934713408
        %v2055 = vunpack.c.0.s8 %v2054
        %v2056 = vperm.slane %v2048, %v2055
        %v2057 = vrot.slane %v2052, 4
        %v2058 = vsel %vm857, 0, %v2057
        %v2059 = vrot.slane %v2056, 4
        %v2060 = vsel %vm857, 0, %v2059
        %v2063 = vunpack.c.l.s4 1983009808
        %v2064 = vunpack.c.0.s8 %v2063
        %v2065 = vperm.slane %v1976, %v2064
        %v2068 = vunpack.c.l.s4 1983009808
        %v2069 = vunpack.c.0.s8 %v2068
        %v2070 = vperm.slane %v1982, %v2069
        %v2071 = vrot.slane %v2070, 4
        %v2072 = vsel %vm857, %v2071, %v2065
        %v2073 = vrot.slane %v2065, 4
        %v2074 = vsel %vm857, %v2070, %v2073
        %v2076 = vunpack.c.l.s4 1934713408
        %v2077 = vunpack.c.0.s8 %v2076
        %v2078 = vperm.slane %v2072, %v2077
        %v2080 = vunpack.c.l.s4 1934713408
        %v2081 = vunpack.c.0.s8 %v2080
        %v2082 = vperm.slane %v2074, %v2081
        %v2083 = vrot.slane %v2078, 4
        %v2084 = vsel %vm857, 0, %v2083
        %v2085 = vrot.slane %v2082, 4
        %v2086 = vsel %vm857, 0, %v2085
        %v2087 = vsel %vm857, %v2007, %v2000
        %v2089 = vunpack.c.l.s4 1983009808
        %v2090 = vunpack.c.0.s8 %v2089
        %v2091 = vperm.slane %v2087, %v2090
        %v2092 = vrot.slane %v2008, 4
        %v2093 = vsel %vm857, %v2092, %v2006
        %v2095 = vunpack.c.l.s4 1983009808
        %v2096 = vunpack.c.0.s8 %v2095
        %v2097 = vperm.slane %v2093, %v2096
        %v2098 = vrot.slane %v2097, 4
        %v2099 = vsel %vm857, %v2098, %v2091
        %v2101 = vunpack.c.l.s4 1934713408
        %v2102 = vunpack.c.0.s8 %v2101
        %v2103 = vperm.slane %v2099, %v2102
        %v2104 = vrot.slane %v2103, 4
        %v2105 = vsel %vm857, 0, %v2104
        %v2106 = vsel %vm857, %v2033, %v2026
        %v2108 = vunpack.c.l.s4 1983009808
        %v2109 = vunpack.c.0.s8 %v2108
        %v2110 = vperm.slane %v2106, %v2109
        %v2111 = vrot.slane %v2034, 4
        %v2112 = vsel %vm857, %v2111, %v2032
        %v2114 = vunpack.c.l.s4 1983009808
        %v2115 = vunpack.c.0.s8 %v2114
        %v2116 = vperm.slane %v2112, %v2115
        %v2117 = vrot.slane %v2116, 4
        %v2118 = vsel %vm857, %v2117, %v2110
        %v2120 = vunpack.c.l.s4 1934713408
        %v2121 = vunpack.c.0.s8 %v2120
        %v2122 = vperm.slane %v2118, %v2121
        %v2123 = vrot.slane %v2122, 4
        %v2124 = vsel %vm857, 0, %v2123
        %v2125 = vsel %vm857, %v2059, %v2052
        %v2127 = vunpack.c.l.s4 1983009808
        %v2128 = vunpack.c.0.s8 %v2127
        %v2129 = vperm.slane %v2125, %v2128
        %v2130 = vrot.slane %v2060, 4
        %v2131 = vsel %vm857, %v2130, %v2058
        %v2133 = vunpack.c.l.s4 1983009808
        %v2134 = vunpack.c.0.s8 %v2133
        %v2135 = vperm.slane %v2131, %v2134
        %v2136 = vrot.slane %v2135, 4
        %v2137 = vsel %vm857, %v2136, %v2129
        %v2139 = vunpack.c.l.s4 1934713408
        %v2140 = vunpack.c.0.s8 %v2139
        %v2141 = vperm.slane %v2137, %v2140
        %v2142 = vrot.slane %v2141, 4
        %v2143 = vsel %vm857, 0, %v2142
        %v2144 = vsel %vm857, %v2085, %v2078
        %v2146 = vunpack.c.l.s4 1983009808
        %v2147 = vunpack.c.0.s8 %v2146
        %v2148 = vperm.slane %v2144, %v2147
        %v2149 = vrot.slane %v2086, 4
        %v2150 = vsel %vm857, %v2149, %v2084
        %v2152 = vunpack.c.l.s4 1983009808
        %v2153 = vunpack.c.0.s8 %v2152
        %v2154 = vperm.slane %v2150, %v2153
        %v2155 = vrot.slane %v2154, 4
        %v2156 = vsel %vm857, %v2155, %v2148
        %v2158 = vunpack.c.l.s4 1934713408
        %v2159 = vunpack.c.0.s8 %v2158
        %v2160 = vperm.slane %v2156, %v2159
        %v2161 = vrot.slane %v2160, 4
        %v2162 = vsel %vm857, 0, %v2161
        %v2165 = vpack.i.b16 %v2122, %v2103
        %v2166 = vshrl.u32 %v2103, 16
        %v2167 = vshrl.u32 %v2122, 16
        %v2168 = vpack.i.b16 %v2167, %v2166
        %v2171 = vpack.i.b16 %v2124, %v2105
        %v2172 = vshrl.u32 %v2105, 16
        %v2173 = vshrl.u32 %v2124, 16
        %v2174 = vpack.i.b16 %v2173, %v2172
        %v2177 = vpack.i.b16 %v2160, %v2141
        %v2178 = vshrl.u32 %v2141, 16
        %v2179 = vshrl.u32 %v2160, 16
        %v2180 = vpack.i.b16 %v2179, %v2178
        %v2183 = vpack.i.b16 %v2162, %v2143
        %v2184 = vshrl.u32 %v2143, 16
        %v2185 = vshrl.u32 %v2162, 16
        %v2186 = vpack.i.b16 %v2185, %v2184
        %v2187 = vunpack.c.l.b16 %v2165
        %v2188 = vunpack.c.l.b16 %v2177
        %v2189 = vpack.c.b16 %v2188, %v2187
        %v2190 = vunpack.c.l.b16 %v2168
        %v2191 = vunpack.c.l.b16 %v2180
        %v2192 = vpack.c.b16 %v2191, %v2190
        %2193 = vrot.lane.b32.xlu0 %v2192, 8
        %v2194 = vpop.permute.xlu0 %2193
        %v2195 = vunpack.c.l.b16 %v2171
        %v2196 = vunpack.c.l.b16 %v2183
        %v2197 = vpack.c.b16 %v2196, %v2195
        %2198 = vrot.lane.b32.xlu0 %v2197, 16
        %v2199 = vpop.permute.xlu0 %2198
        %v2200 = vunpack.c.l.b16 %v2174
        %v2201 = vunpack.c.l.b16 %v2186
        %v2202 = vpack.c.b16 %v2201, %v2200
        %2203 = vrot.lane.b32.xlu0 %v2202, 24
        %v2204 = vpop.permute.xlu0 %2203
        %v2207 = vsel %vm1541, %v2189, %v2194
        %vm2208 = vcmask 130048
        %v2210 = vsel %vm2208, %v2207, %v2199
        %vm2211 = vcmask 195584
        %v2213 = vsel %vm2211, %v2210, %v2204
        %v2214 = vld [vmem:[%s728] sm:$0xf]
        %v2215 = vld [vmem:[%s728 + $0x4] sm:$0xf]
        %v2216 = vld [vmem:[%s728 + $0x8] sm:$0xf]
        %v2217 = vld [vmem:[%s728 + $0xc] sm:$0xf]
        %v2218 = vld [vmem:[%s731] sm:$0x1]
        %v2220 = vperm.slane %v2218, 0
        %v2226 = vunpack.c.l.b16 %v2214
        %v2227 = vunpack.c.l.b16 %v2215
        %v2228 = vunpack.c.l.b16 %v2216
        %v2229 = vunpack.c.l.b16 %v2217
        %v2230 = vpack.c.b16 %v2227, %v2226
        %v2231 = vpack.c.b16 %v2229, %v2228
        %v2234 = vsel %vm788, %v2213, 0
        %2236 = vmatpush.bf16.msra.mxu0 0
        %2237 = vmatpush.bf16.msra.mxu0 0
        %2238 = vmatpush.bf16.msra.mxu0 0
        %2239 = vmatpush.bf16.msra.mxu0 0
        %2240 = vmatpush.bf16.msra.mxu0 0
        %2241 = vmatpush.bf16.msra.mxu0 0
        %2242 = vmatpush.bf16.msra.mxu0 %v2231
        %2243 = vmatpush.bf16.msra.mxu0 %v2230
        %2244 = vmatmul.bf16.gmra.mxu0 %v2234
        %v2245 = vpop.f32.mrf.mxu0
        %v2246 = vadd.f32 %v2220, %v2245
        %v2247 = vpop.f32.mrf.mxu0
        %v2248 = vadd.f32 %v2220, %v2247
        %2249 = vdwg.mxu0
        %v2250 = vadd.f32 %v2246, %v765
        %v2251 = vadd.f32 %v2248, %v766
        %v2252 = vld [vmem:[%s734] sm:$0x1]
        %v2253 = vld [vmem:[%s600] sm:$0x1]
        %v2254 = vsel %vm788, %v2250, 0.0
        %2255 = vadd.xlane.f32.xlu0 %v2254
        %v2256 = vpop.xlane.xlu0 %2255
        %v2257 = vsel %vm788, %v2251, 0.0
        %2258 = vadd.xlane.f32.xlu0 %v2257
        %v2259 = vpop.xlane.xlu0 %2258
        %v2260 = vrcp.pop 32.0
        %v2261 = vmul.f32 32.0, %v2260
        %v2262 = vsub.f32 1.0, %v2261
        %v2263 = vmul.f32 %v2260, %v2262
        %v2264 = vadd.f32 %v2260, %v2263
        %vm2265 = vweird.f32 %v2260
        %v2266 = vsel %vm2265, %v2260, %v2264
        %v2267 = vmul.f32 %v2256, %v2266
        %v2268 = vmul.f32 %v2259, %v2266
        %v2269 = vsub.f32 %v2250, %v2267
        %v2270 = vsub.f32 %v2251, %v2268
        %v2271 = vmul.f32 %v2269, %v2269
        %v2272 = vmul.f32 %v2270, %v2270
        %v2273 = vsel %vm788, %v2271, 0.0
        %2274 = vadd.xlane.f32.xlu0 %v2273
        %v2275 = vpop.xlane.xlu0 %2274
        %v2276 = vsel %vm788, %v2272, 0.0
        %2277 = vadd.xlane.f32.xlu0 %v2276
        %v2278 = vpop.xlane.xlu0 %2277
        %v2279 = vmul.f32 %v2275, %v2266
        %v2280 = vmul.f32 %v2278, %v2266
        %v2281 = vadd.f32 %v2279, 1e-06
        %v2282 = vadd.f32 %v2280, 1e-06
        %v2283 = vrsqrt.pop %v2281
        %v2284 = vmul.f32 %v2283, %v2281
        %v2285 = vmul.f32 %v2284, %v2283
        %v2286 = vmul.f32 0.5, %v2285
        %v2287 = vsub.f32 1.5, %v2286
        %v2288 = vmul.f32 %v2283, %v2287
        %vm2289 = vweird.f32 %v2281
        %vm2290 = vweird.f32 %v2283
        %vm2291 = vmor %vm2289, %vm2290
        %v2292 = vsel %vm2291, %v2283, %v2288
        %v2293 = vrsqrt.pop %v2282
        %v2294 = vmul.f32 %v2293, %v2282
        %v2295 = vmul.f32 %v2294, %v2293
        %v2296 = vmul.f32 0.5, %v2295
        %v2297 = vsub.f32 1.5, %v2296
        %v2298 = vmul.f32 %v2293, %v2297
        %vm2299 = vweird.f32 %v2282
        %vm2300 = vweird.f32 %v2293
        %vm2301 = vmor %vm2299, %vm2300
        %v2302 = vsel %vm2301, %v2293, %v2298
        %v2303 = vmul.f32 %v2269, %v2292
        %v2304 = vmul.f32 %v2270, %v2302
        %v2306 = vperm.slane %v2252, 0
        %v2308 = vmul.f32 %v2303, %v2306
        %v2309 = vmul.f32 %v2304, %v2306
        %v2311 = vperm.slane %v2253, 0
        %v2313 = vadd.f32 %v2308, %v2311
        %v2314 = vadd.f32 %v2309, %v2311
        %v2315 = vpack.c.bf16 %v2314, %v2313
        %v2316 = vld [vmem:[%s739] sm:$0xf]
        %v2317 = vld [vmem:[%s739 + $0x4] sm:$0xf]
        %v2318 = vld [vmem:[%s739 + $0x8] sm:$0xf]
        %v2319 = vld [vmem:[%s739 + $0xc] sm:$0xf]
        %v2320 = vld [vmem:[%s742] sm:$0x1]
        %v2322 = vperm.slane %v2320, 0
        %v2328 = vunpack.c.l.b16 %v2316
        %v2329 = vunpack.c.l.b16 %v2317
        %v2330 = vunpack.c.l.b16 %v2318
        %v2331 = vunpack.c.l.b16 %v2319
        %v2332 = vpack.c.b16 %v2329, %v2328
        %v2333 = vpack.c.b16 %v2331, %v2330
        %v2337 = vsel %vm788, %v2315, 0
        %2339 = vmatpush.bf16.msra.mxu0 0
        %2340 = vmatpush.bf16.msra.mxu0 0
        %2341 = vmatpush.bf16.msra.mxu0 0
        %2342 = vmatpush.bf16.msra.mxu0 0
        %2343 = vmatpush.bf16.msra.mxu0 0
        %2344 = vmatpush.bf16.msra.mxu0 0
        %2345 = vmatpush.bf16.msra.mxu0 %v2333
        %2346 = vmatpush.bf16.msra.mxu0 %v2332
        %2347 = vmatmul.bf16.gmra.mxu0 %v2337
        %v2348 = vpop.f32.mrf.mxu0
        %v2349 = vadd.f32 %v2322, %v2348
        %v2350 = vpop.f32.mrf.mxu0
        %v2351 = vadd.f32 %v2322, %v2350
        %2352 = vdwg.mxu0
        %v2353 = vmul.f32 %v2349, %v2349
        %v2354 = vmul.f32 %v2351, %v2351
        %v2355 = vmul.f32 %v2349, %v2353
        %v2356 = vmul.f32 %v2351, %v2354
        %v2357 = vmul.f32 %v2355, 0.044715
        %v2358 = vmul.f32 %v2356, 0.044715
        %v2359 = vadd.f32 %v2349, %v2357
        %v2360 = vadd.f32 %v2351, %v2358
        %v2361 = vmul.f32 %v2359, 0.7978846
        %v2362 = vmul.f32 %v2360, 0.7978846
        %v2363 = vtanh.pop %v2361
        %v2364 = vtanh.pop %v2362
        %v2365 = vadd.f32 %v2363, 1.0
        %v2366 = vadd.f32 %v2364, 1.0
        %v2367 = vmul.f32 %v2365, 0.5
        %v2368 = vmul.f32 %v2366, 0.5
        %v2369 = vmul.f32 %v2349, %v2367
        %v2370 = vmul.f32 %v2351, %v2368
        %v2371 = vpack.c.bf16 %v2370, %v2369
        %v2372 = vld [vmem:[%s747] sm:$0xf]
        %v2373 = vld [vmem:[%s747 + $0x4] sm:$0xf]
        %v2374 = vld [vmem:[%s747 + $0x8] sm:$0xf]
        %v2375 = vld [vmem:[%s747 + $0xc] sm:$0xf]
        %v2376 = vld [vmem:[%s747 + $0x10] sm:$0xf]
        %v2377 = vld [vmem:[%s747 + $0x14] sm:$0xf]
        %v2378 = vld [vmem:[%s747 + $0x18] sm:$0xf]
        %v2379 = vld [vmem:[%s747 + $0x1c] sm:$0xf]
        %v2380 = vld [vmem:[%s747 + $0x20] sm:$0xf]
        %v2381 = vld [vmem:[%s747 + $0x24] sm:$0xf]
        %v2382 = vld [vmem:[%s747 + $0x28] sm:$0xf]
        %v2383 = vld [vmem:[%s747 + $0x2c] sm:$0xf]
        %v2384 = vld [vmem:[%s747 + $0x30] sm:$0xf]
        %v2385 = vld [vmem:[%s747 + $0x34] sm:$0xf]
        %v2386 = vld [vmem:[%s747 + $0x38] sm:$0xf]
        %v2387 = vld [vmem:[%s747 + $0x3c] sm:$0xf]
        %v2388 = vld [vmem:[%s750] sm:$0x1]
        %v2390 = vperm.slane %v2388, 0
        %v2408 = vunpack.c.l.b16 %v2372
        %v2409 = vunpack.c.l.b16 %v2373
        %v2410 = vunpack.c.l.b16 %v2374
        %v2411 = vunpack.c.l.b16 %v2375
        %v2412 = vunpack.c.l.b16 %v2376
        %v2413 = vunpack.c.l.b16 %v2377
        %v2414 = vunpack.c.l.b16 %v2378
        %v2415 = vunpack.c.l.b16 %v2379
        %v2416 = vunpack.c.l.b16 %v2380
        %v2417 = vunpack.c.l.b16 %v2381
        %v2418 = vunpack.c.l.b16 %v2382
        %v2419 = vunpack.c.l.b16 %v2383
        %v2420 = vunpack.c.l.b16 %v2384
        %v2421 = vunpack.c.l.b16 %v2385
        %v2422 = vunpack.c.l.b16 %v2386
        %v2423 = vunpack.c.l.b16 %v2387
        %v2424 = vpack.c.b16 %v2409, %v2408
        %v2425 = vpack.c.b16 %v2411, %v2410
        %v2426 = vpack.c.b16 %v2413, %v2412
        %v2427 = vpack.c.b16 %v2415, %v2414
        %v2428 = vpack.c.b16 %v2417, %v2416
        %v2429 = vpack.c.b16 %v2419, %v2418
        %v2430 = vpack.c.b16 %v2421, %v2420
        %v2431 = vpack.c.b16 %v2423, %v2422
        %2440 = vmatpush.bf16.msra.mxu0 %v2431
        %2441 = vmatpush.bf16.msra.mxu0 %v2430
        %2442 = vmatpush.bf16.msra.mxu0 %v2429
        %2443 = vmatpush.bf16.msra.mxu0 %v2428
        %2444 = vmatpush.bf16.msra.mxu0 %v2427
        %2445 = vmatpush.bf16.msra.mxu0 %v2426
        %2446 = vmatpush.bf16.msra.mxu0 %v2425
        %2447 = vmatpush.bf16.msra.mxu0 %v2424
        %2448 = vmatmul.bf16.gmra.mxu0 %v2371
        %v2449 = vpop.f32.mrf.mxu0
        %v2450 = vadd.f32 %v2390, %v2449
        %v2451 = vpop.f32.mrf.mxu0
        %v2452 = vadd.f32 %v2390, %v2451
        %2453 = vdwg.mxu0
        %v2454 = vadd.f32 %v2450, %v2313
        %v2455 = vadd.f32 %v2452, %v2314
        %v2456 = vld [vmem:[%s753] sm:$0x1]
        %v2457 = vld [vmem:[%s609] sm:$0x1]
        %v2458 = vsel %vm788, %v2454, 0.0
        %2459 = vadd.xlane.f32.xlu0 %v2458
        %v2460 = vpop.xlane.xlu0 %2459
        %v2461 = vsel %vm788, %v2455, 0.0
        %2462 = vadd.xlane.f32.xlu0 %v2461
        %v2463 = vpop.xlane.xlu0 %2462
        %v2464 = vmul.f32 %v2460, %v2266
        %v2465 = vmul.f32 %v2463, %v2266
        %v2466 = vsub.f32 %v2454, %v2464
        %v2467 = vsub.f32 %v2455, %v2465
        %v2468 = vmul.f32 %v2466, %v2466
        %v2469 = vmul.f32 %v2467, %v2467
        %v2470 = vsel %vm788, %v2468, 0.0
        %2471 = vadd.xlane.f32.xlu0 %v2470
        %v2472 = vpop.xlane.xlu0 %2471
        %v2473 = vsel %vm788, %v2469, 0.0
        %2474 = vadd.xlane.f32.xlu0 %v2473
        %v2475 = vpop.xlane.xlu0 %2474
        %v2476 = vmul.f32 %v2472, %v2266
        %v2477 = vmul.f32 %v2475, %v2266
        %v2478 = vadd.f32 %v2476, 1e-06
        %v2479 = vadd.f32 %v2477, 1e-06
        %v2480 = vrsqrt.pop %v2478
        %v2481 = vmul.f32 %v2480, %v2478
        %v2482 = vmul.f32 %v2481, %v2480
        %v2483 = vmul.f32 0.5, %v2482
        %v2484 = vsub.f32 1.5, %v2483
        %v2485 = vmul.f32 %v2480, %v2484
        %vm2486 = vweird.f32 %v2478
        %vm2487 = vweird.f32 %v2480
        %vm2488 = vmor %vm2486, %vm2487
        %v2489 = vsel %vm2488, %v2480, %v2485
        %v2490 = vrsqrt.pop %v2479
        %v2491 = vmul.f32 %v2490, %v2479
        %v2492 = vmul.f32 %v2491, %v2490
        %v2493 = vmul.f32 0.5, %v2492
        %v2494 = vsub.f32 1.5, %v2493
        %v2495 = vmul.f32 %v2490, %v2494
        %vm2496 = vweird.f32 %v2479
        %vm2497 = vweird.f32 %v2490
        %vm2498 = vmor %vm2496, %vm2497
        %v2499 = vsel %vm2498, %v2490, %v2495
        %v2500 = vmul.f32 %v2466, %v2489
        %v2501 = vmul.f32 %v2467, %v2499
        %v2503 = vperm.slane %v2456, 0
        %v2505 = vmul.f32 %v2500, %v2503
        %v2506 = vmul.f32 %v2501, %v2503
        %v2508 = vperm.slane %v2457, 0
        %v2510 = vadd.f32 %v2505, %v2508
        %v2511 = vadd.f32 %v2506, %v2508
        %2512 = vst.msk [vmem:[#allocation2] sm:$0xff] %vm788, %v2510
        %2513 = vst.msk [vmem:[#allocation2 + $0x8] sm:$0xff] %vm788, %v2511
        %p2514 = scmp.eq.s32.totalorder %s39, 1
        // Predicated region
        $region93: #{tpu_custom_call.1} parent=75 // pred_check
          %p2515 = pneg %p2514
        $region94: #{tpu_custom_call.1} parent=75 // pred_check_branch
          %2517 = sbr.rel (%p2515) target = $region96
        $region95: #{tpu_custom_call.1} parent=75 // pred_region
          %2518 = vst.msk [vmem:[%s706] sm:$0xff] %vm788, %v2510
          %2519 = vst.msk [vmem:[%s706 + $0x8] sm:$0xff] %vm788, %v2511
        $region96: #{tpu_custom_call.1} parent=75 // pred_fallthru
          _
        %s2520 = sand.u32 %s418, 1
        %s2521 = scalar_lea.sflag [#allocation5], %s2520
        %s2522 = sand.u32 %s418, 1
        %s2523 = smul.addr %s2522, 16
        %s2524 = scalar_lea.vmem [#allocation9], %s2523
        // Predicated region
        $region97: #{tpu_custom_call.1} parent=75 // pred_check
          %p2525 = pneg %p428
        $region98: #{tpu_custom_call.1} parent=75 // pred_check_branch
          %2527 = sbr.rel (%p2525) target = $region100
        $region99: #{tpu_custom_call.1} parent=75 // pred_region
          %s2528 = smul.u32 2, %s38
          %2530 = vsyncadd %s2521, 0
          %s2531 = smul.addr %s2528, 8
          %s2532 = scalar_lea.hbm %s14, %s2531
          %s2533 = sshll.u32 %s2524, 4
          %s2534 = int_to_ptr.vmem [resolvable:$true] %s2533
          %s2535 = sshll.u32 %s2532, 4
          %s2536 = int_to_ptr.hbm [resolvable:$true] %s2535
          %2541 = dma.vmem_to_hbm [thread:$0]  %s2534, 256, %s2536, %s2521, 128, 128, 8
        $region100: #{tpu_custom_call.1} parent=75 // pred_fallthru
          _
      $region76: #{tpu_custom_call.1} parent=5 // pred_fallthru
        _
      %p2542 = scmp.le.s32.totalorder 2, %s29
      // Predicated region
      $region101: #{tpu_custom_call.1} parent=5 // pred_check
        %p2543 = pneg %p2542
      $region102: #{tpu_custom_call.1} parent=5 // pred_check_branch
        %2545 = sbr.rel (%p2543) target = $region104
      $region103: #{tpu_custom_call.1} parent=5 // pred_region
        %s2546 = ssub.s32 %s29, 2
        // Predicated region
        $region105: #{tpu_custom_call.1} parent=103 // pred_check
          %p2547 = pneg %p434
        $region106: #{tpu_custom_call.1} parent=103 // pred_check_branch
          %2549 = sbr.rel (%p2547) target = $region108
        $region107: #{tpu_custom_call.1} parent=103 // pred_region
          %s2550 = sand.u32 %s419, 1
          %s2551 = scalar_lea.sflag [#allocation5], %s2550
          %s2552 = sand.u32 %s419, 1
          %s2553 = smul.addr %s2552, 16
          %s2554 = scalar_lea.vmem [#allocation9], %s2553
          %2556 = dma.done %s2551, 256
        $region108: #{tpu_custom_call.1} parent=103 // pred_fallthru
          _
      $region104: #{tpu_custom_call.1} parent=5 // pred_fallthru
        _
    $region6: #{tpu_custom_call.1} parent=1 // loop_footer
      %s33 = sadd.s32 1, %s29
    $region7: #{tpu_custom_call.1} parent=1 // loop_footer_branch
      %28 = sbr.rel target = $region3
    $region8: #{tpu_custom_call.1} parent=1 // loop_exit
      _
    %2557 = vsyncpa [#allocation4], 1
    %s2558 = scalar_lea.sflag [#allocation4], 1
    %2559 = vsyncpa %s2558, 1
    %2560 = vsyncpa [#allocation7], 1
    %s2561 = scalar_lea.sflag [#allocation7], 1
    %2562 = vsyncpa %s2561, 1
    %2563 = vsyncpa [#allocation5], 1
    %s2564 = scalar_lea.sflag [#allocation5], 1
    %2565 = vsyncpa %s2564, 1

</llo_original>
